<compile_context>
chip_gen: v7x
topology: tpu7x:2x2x1
jax: 0.10.0
libtpu: 0.0.40
codegen_flags: <defaults>
</compile_context>

<pallas_src>
import functools
import numpy as np
import jax
import jax.numpy as jnp
from jax.experimental import pallas as pl
from jax.experimental.pallas import tpu as pltpu

_VMEM_LIMIT = 64 * 1024 * 1024


def _round_up(x, m):
    return ((x + m - 1) // m) * m


# ----------------------------------------------------------------------------
# Tiled matmul kernel (+ optional fused channels-LayerNorm epilogue)
# ----------------------------------------------------------------------------

def _mm_kernel(a_ref, b_ref, bias_ref, o_ref, acc_ref):
    @pl.when(pl.program_id(2) == 0)
    def _():
        acc_ref[...] = jnp.zeros_like(acc_ref)

    acc_ref[...] += jnp.dot(a_ref[...], b_ref[...],
                            preferred_element_type=jnp.float32)

    @pl.when(pl.program_id(2) == pl.num_programs(2) - 1)
    def _():
        o_ref[...] = (acc_ref[...] + bias_ref[...]).astype(o_ref.dtype)


def _mm_ln_kernel(a_ref, b_ref, bias_ref, g_ref, beta_ref, o_ref, acc_ref, *,
                  n_valid, eps):
    """Matmul + bias + LayerNorm over the (single-tile) N axis, masked to n_valid cols."""
    @pl.when(pl.program_id(2) == 0)
    def _():
        acc_ref[...] = jnp.zeros_like(acc_ref)

    acc_ref[...] += jnp.dot(a_ref[...], b_ref[...],
                            preferred_element_type=jnp.float32)

    @pl.when(pl.program_id(2) == pl.num_programs(2) - 1)
    def _():
        y = acc_ref[...] + bias_ref[...]
        cols = jax.lax.broadcasted_iota(jnp.int32, y.shape, 1)
        valid = cols < n_valid
        inv = 1.0 / float(n_valid)
        mean = jnp.sum(jnp.where(valid, y, 0.0), axis=-1, keepdims=True) * inv
        d = jnp.where(valid, y - mean, 0.0)
        var = jnp.sum(d * d, axis=-1, keepdims=True) * inv
        o_ref[...] = ((y - mean) * jax.lax.rsqrt(var + eps) * g_ref[...]
                      + beta_ref[...]).astype(o_ref.dtype)


def pallas_matmul(a, b, bias=None, ln=None, out_dtype=jnp.float32,
                  tm=128, tn=128, tk=512, ln_eps=1e-6):
    """a:[M,K] x b:[K,N] (bf16 MXU, f32 acc), bias fused; optional fused channel LayerNorm."""
    M, K = a.shape
    K2, N = b.shape
    assert K == K2
    tm = min(tm, _round_up(M, 8))
    if ln is not None:
        tn = _round_up(N, 128)                  # single N tile -> complete row for LN stats
    else:
        tn = min(tn, _round_up(N, 128))
    kr = _round_up(K, 128)
    tk = kr if kr <= 1024 else tk               # single K step when it fits (fewer pad copies)
    Mp, Np, Kp = _round_up(M, tm), _round_up(N, tn), _round_up(K, tk)

    a_p = jnp.pad(a.astype(jnp.bfloat16), ((0, Mp - M), (0, Kp - K)))
    b_p = jnp.pad(b.astype(jnp.bfloat16), ((0, Kp - K), (0, Np - N)))
    if bias is None:
        bias_p = jnp.zeros((1, Np), jnp.float32)
    else:
        bias_p = jnp.pad(bias.reshape(1, N).astype(jnp.float32),
                         ((0, 0), (0, Np - N)))

    grid = (Mp // tm, Np // tn, Kp // tk)
    base_specs = [pl.BlockSpec((tm, tk), lambda i, j, k: (i, k)),
                  pl.BlockSpec((tk, tn), lambda i, j, k: (k, j)),
                  pl.BlockSpec((1, tn), lambda i, j, k: (0, j))]
    common = dict(
        out_shape=jax.ShapeDtypeStruct((Mp, Np), out_dtype),
        grid=grid,
        out_specs=pl.BlockSpec((tm, tn), lambda i, j, k: (i, j)),
        scratch_shapes=[pltpu.VMEM((tm, tn), jnp.float32)],
        compiler_params=pltpu.CompilerParams(
            dimension_semantics=("parallel", "parallel", "arbitrary"),
            vmem_limit_bytes=_VMEM_LIMIT),
    )

    if ln is None:
        out = pl.pallas_call(_mm_kernel, in_specs=base_specs, **common)(a_p, b_p, bias_p)
    else:
        g, beta = ln
        g_p = jnp.pad(g.reshape(1, N).astype(jnp.float32), ((0, 0), (0, Np - N)))
        beta_p = jnp.pad(beta.reshape(1, N).astype(jnp.float32), ((0, 0), (0, Np - N)))
        out = pl.pallas_call(
            functools.partial(_mm_ln_kernel, n_valid=N, eps=ln_eps),
            in_specs=base_specs + [pl.BlockSpec((1, tn), lambda i, j, k: (0, j)),
                                   pl.BlockSpec((1, tn), lambda i, j, k: (0, j))],
            **common)(a_p, b_p, bias_p, g_p, beta_p)
    return out[:M, :N]


# ----------------------------------------------------------------------------
# Implicit-GEMM 3x3x3 conv (stride 1, pad 1) with optional fused InstanceNorm+LeakyReLU
# ----------------------------------------------------------------------------

def _conv3x3_kernel(x_ref, w_ref, m_ref, o_ref, *, offsets, rows, cin,
                    fuse_in, relu, inv_count, eps):
    """x_ref: (1, Sx, Cin) halo-padded, row-flattened sample; w_ref: (27, Cin, Cout);
    m_ref: (Sp, 1) valid-row mask; o_ref: (1, Sp, Cout)."""
    xv = x_ref[...][0]                              # (Sx, Cin)
    wv = w_ref[...]                                 # (27, Cin, Cout) bf16

    acc = None
    for t, off in enumerate(offsets):               # 27 static, unrolled taps
        xa = xv[off:off + rows, :]                  # (rows, Cin) static slice
        wt = wv[t]                                  # (Cin, Cout)
        if cin <= 4:                                # tiny-Cin path: VPU outer products
            contrib = xa[:, 0:1].astype(jnp.float32) * wt[0].astype(jnp.float32)
            for ci in range(1, cin):
                contrib = contrib + (xa[:, ci:ci + 1].astype(jnp.float32)
                                     * wt[ci].astype(jnp.float32))
        else:                                       # MXU path
            contrib = jnp.dot(xa, wt, preferred_element_type=jnp.float32)
        acc = contrib if acc is None else acc + contrib

    if fuse_in:                                     # InstanceNorm over the valid rows
        m = m_ref[...]                              # (rows, 1)
        mean = jnp.sum(acc * m, axis=0, keepdims=True) * inv_count     # (1, Cout)
        cen = (acc - mean) * m
        var = jnp.sum(cen * cen, axis=0, keepdims=True) * inv_count
        y = (acc - mean) * jax.lax.rsqrt(var + eps)
        if relu:
            y = jnp.where(y >= 0, y, 0.01 * y)
        o_ref[...] = y[None]
    else:
        o_ref[...] = acc[None]


def conv3x3(x, w, *, fuse_in=False, relu=False, eps=1e-5):
    """3x3x3 conv, stride 1, padding 1 (no bias).  Optionally fuses InstanceNorm(+LeakyReLU).

    Implicit GEMM: the sample is halo-padded once (bf16), row-flattened, and the 27 taps are
    accumulated in-kernel; valid output rows are a strided subset selected by the wrapper.
    """
    N, D, H, W, Cin = x.shape
    Cout = w.shape[-1]
    Dp, Hp, Wp = D + 2, H + 2, W + 2
    Sp = Dp * Hp * Wp
    # One pad: 3 extra trailing depth planes provide >= max-tap-offset zero rows.
    in_dtype = jnp.bfloat16 if Cin >= 8 else jnp.float32
    xp = jnp.pad(x.astype(in_dtype), ((0, 0), (1, 4), (1, 1), (1, 1), (0, 0)))
    Sx = (D + 5) * Hp * Wp
    xf = xp.reshape(N, Sx, Cin)

    offsets = tuple(int(a * Hp * Wp + b * Wp + c)
                    for a in range(3) for b in range(3) for c in range(3))
    dd, hh, ww = np.meshgrid(np.arange(Dp), np.arange(Hp), np.arange(Wp), indexing='ij')
    mask = jnp.asarray(((dd < D) & (hh < H) & (ww < W))
                       .astype(np.float32).reshape(Sp, 1))
    wf = w.reshape(27, Cin, Cout).astype(jnp.bfloat16)

    kern = functools.partial(_conv3x3_kernel, offsets=offsets, rows=Sp, cin=Cin,
                             fuse_in=fuse_in, relu=relu,
                             inv_count=1.0 / float(D * H * W), eps=eps)
    out = pl.pallas_call(
        kern,
        out_shape=jax.ShapeDtypeStruct((N, Sp, Cout), jnp.float32),
        grid=(N,),
        in_specs=[pl.BlockSpec((1, Sx, Cin), lambda n: (n, 0, 0)),
                  pl.BlockSpec((27, Cin, Cout), lambda n: (0, 0, 0)),
                  pl.BlockSpec((Sp, 1), lambda n: (0, 0))],
        out_specs=pl.BlockSpec((1, Sp, Cout), lambda n: (n, 0, 0)),
        compiler_params=pltpu.CompilerParams(
            dimension_semantics=("parallel",),
            vmem_limit_bytes=_VMEM_LIMIT),
    )(xf, wf, mask)
    return out.reshape(N, Dp, Hp, Wp, Cout)[:, :D, :H, :W, :]


# ----------------------------------------------------------------------------
# 7x7x7 depthwise conv (padding 3) — register-carried tap accumulation
# ----------------------------------------------------------------------------

def _dw_kernel(xp_ref, w_ref, b_ref, o_ref, *, D, H, W):
    """xp_ref: (1, D+6, H+6, W+6, C); w_ref: (7,7,7,C); b_ref: (1,C); o_ref: (1,D,H,W,C)."""
    wv = w_ref[...]
    acc = None
    for a in range(7):
        for bb in range(7):
            slab = xp_ref[:, a:a + D, bb:bb + H, :, :]      # (1, D, H, W+6, C)
            for c in range(7):
                term = slab[:, :, :, c:c + W, :] * wv[a, bb, c]
                acc = term if acc is None else acc + term
    o_ref[...] = acc + b_ref[...]                           # single store, bias fused


def depthwise_conv7(x, w, b):
    """7x7x7 depthwise conv, padding 3. x: (N,D,H,W,C), w: (7,7,7,C), b: (C,)."""
    N, D, H, W, C = x.shape
    xp = jnp.pad(x, ((0, 0), (3, 3), (3, 3), (3, 3), (0, 0)))
    Dp, Hp, Wp = D + 6, H + 6, W + 6
    return pl.pallas_call(
        functools.partial(_dw_kernel, D=D, H=H, W=W),
        out_shape=jax.ShapeDtypeStruct((N, D, H, W, C), jnp.float32),
        grid=(N,),
        in_specs=[
            pl.BlockSpec((1, Dp, Hp, Wp, C), lambda n: (n, 0, 0, 0, 0)),
            pl.BlockSpec((7, 7, 7, C), lambda n: (0, 0, 0, 0)),
            pl.BlockSpec((1, C), lambda n: (0, 0)),
        ],
        out_specs=pl.BlockSpec((1, D, H, W, C), lambda n: (n, 0, 0, 0, 0)),
        compiler_params=pltpu.CompilerParams(
            dimension_semantics=("parallel",),
            vmem_limit_bytes=_VMEM_LIMIT),
    )(xp, w, b.reshape(1, C))


# ----------------------------------------------------------------------------
# Fused ux_block MLP: LayerNorm -> pw1 -> GELU -> pw2 -> residual + layer-scale
# ----------------------------------------------------------------------------

def _uxmlp_kernel(h_ref, res_ref, lng_ref, lnb_ref, w1_ref, b1_ref,
                  w2_ref, b2_ref, gam_ref, o_ref):
    h = h_ref[...]                                           # (tm, C) f32
    mean = jnp.mean(h, axis=-1, keepdims=True)
    var = jnp.mean((h - mean) ** 2, axis=-1, keepdims=True)
    y = (h - mean) * jax.lax.rsqrt(var + 1e-6) * lng_ref[...] + lnb_ref[...]
    z = jnp.dot(y.astype(jnp.bfloat16), w1_ref[...],
                preferred_element_type=jnp.float32) + b1_ref[...]
    z = 0.5 * z * (1.0 + jax.lax.erf(z * (1.0 / np.sqrt(2.0))))   # exact GELU (nn.GELU)
    z = jnp.dot(z.astype(jnp.bfloat16), w2_ref[...],
                preferred_element_type=jnp.float32) + b2_ref[...]
    o_ref[...] = res_ref[...] + gam_ref[...] * z


def ux_mlp(h2d, res2d, p, tm=256):
    """h2d, res2d: (M, C); returns res + gamma * pw2(gelu(pw1(LN(h))))  (M, C)."""
    M, C = h2d.shape
    H4 = p['pw1_w'].shape[1]
    tm = min(tm, _round_up(M, 8))
    Mp = _round_up(M, tm)
    h_p = jnp.pad(h2d, ((0, Mp - M), (0, 0)))
    r_p = jnp.pad(res2d, ((0, Mp - M), (0, 0)))

    def full(shape):
        return pl.BlockSpec(shape, lambda i: (0,) * len(shape))

    out = pl.pallas_call(
        _uxmlp_kernel,
        out_shape=jax.ShapeDtypeStruct((Mp, C), jnp.float32),
        grid=(Mp // tm,),
        in_specs=[
            pl.BlockSpec((tm, C), lambda i: (i, 0)),
            pl.BlockSpec((tm, C), lambda i: (i, 0)),
            full((1, C)), full((1, C)),
            full((C, H4)), full((1, H4)),
            full((H4, C)), full((1, C)),
            full((1, C)),
        ],
        out_specs=pl.BlockSpec((tm, C), lambda i: (i, 0)),
        compiler_params=pltpu.CompilerParams(
            dimension_semantics=("parallel",),
            vmem_limit_bytes=_VMEM_LIMIT),
    )(h_p, r_p,
      p['ln_w'].reshape(1, C), p['ln_b'].reshape(1, C),
      p['pw1_w'].astype(jnp.bfloat16), p['pw1_b'].reshape(1, H4),
      p['pw2_w'].astype(jnp.bfloat16), p['pw2_b'].reshape(1, C),
      p['gamma'].reshape(1, C))
    return out[:M]


# ----------------------------------------------------------------------------
# LayerNorm / InstanceNorm kernels
# ----------------------------------------------------------------------------

def _ln_kernel(x_ref, g_ref, b_ref, o_ref, *, eps):
    x = x_ref[...]
    mean = jnp.mean(x, axis=-1, keepdims=True)
    var = jnp.mean((x - mean) ** 2, axis=-1, keepdims=True)
    o_ref[...] = (x - mean) * jax.lax.rsqrt(var + eps) * g_ref[...] + b_ref[...]


def layernorm2d(x2d, g, b, eps=1e-6, tm=512):
    M, C = x2d.shape
    tm = min(tm, _round_up(M, 8))
    Mp = _round_up(M, tm)
    x_p = jnp.pad(x2d, ((0, Mp - M), (0, 0)))
    out = pl.pallas_call(
        functools.partial(_ln_kernel, eps=eps),
        out_shape=jax.ShapeDtypeStruct((Mp, C), jnp.float32),
        grid=(Mp // tm,),
        in_specs=[pl.BlockSpec((tm, C), lambda i: (i, 0)),
                  pl.BlockSpec((1, C), lambda i: (0, 0)),
                  pl.BlockSpec((1, C), lambda i: (0, 0))],
        out_specs=pl.BlockSpec((tm, C), lambda i: (i, 0)),
        compiler_params=pltpu.CompilerParams(dimension_semantics=("parallel",)),
    )(x_p, g.reshape(1, C), b.reshape(1, C))
    return out[:M]


def _in_kernel(x_ref, o_ref, *, relu):
    x = x_ref[...]                                 # (1, S, C)
    mean = jnp.mean(x, axis=1, keepdims=True)
    var = jnp.mean((x - mean) ** 2, axis=1, keepdims=True)   # biased, like PyTorch IN
    y = (x - mean) * jax.lax.rsqrt(var + 1e-5)
    if relu:
        y = jnp.where(y >= 0, y, 0.01 * y)
    o_ref[...] = y


def _in_add_lrelu_kernel(x_ref, r_ref, o_ref):
    x = x_ref[...]
    mean = jnp.mean(x, axis=1, keepdims=True)
    var = jnp.mean((x - mean) ** 2, axis=1, keepdims=True)
    y = (x - mean) * jax.lax.rsqrt(var + 1e-5) + r_ref[...]
    o_ref[...] = jnp.where(y >= 0, y, 0.01 * y)


def instance_norm(x, relu=False):
    """InstanceNorm3d(affine=False, eps=1e-5) + optional LeakyReLU(0.01). Grid over batch."""
    N, D, H, W, C = x.shape
    S = D * H * W
    xr = x.reshape(N, S, C)
    out = pl.pallas_call(
        functools.partial(_in_kernel, relu=relu),
        out_shape=jax.ShapeDtypeStruct((N, S, C), jnp.float32),
        grid=(N,),
        in_specs=[pl.BlockSpec((1, S, C), lambda n: (n, 0, 0))],
        out_specs=pl.BlockSpec((1, S, C), lambda n: (n, 0, 0)),
        compiler_params=pltpu.CompilerParams(
            dimension_semantics=("parallel",),
            vmem_limit_bytes=_VMEM_LIMIT),
    )(xr)
    return out.reshape(x.shape)


def instance_norm_add_lrelu(x, res):
    """LeakyReLU(IN(x) + res): fused final op of the UnetResBlock."""
    N, D, H, W, C = x.shape
    S = D * H * W
    out = pl.pallas_call(
        _in_add_lrelu_kernel,
        out_shape=jax.ShapeDtypeStruct((N, S, C), jnp.float32),
        grid=(N,),
        in_specs=[pl.BlockSpec((1, S, C), lambda n: (n, 0, 0)),
                  pl.BlockSpec((1, S, C), lambda n: (n, 0, 0))],
        out_specs=pl.BlockSpec((1, S, C), lambda n: (n, 0, 0)),
        compiler_params=pltpu.CompilerParams(
            dimension_semantics=("parallel",),
            vmem_limit_bytes=_VMEM_LIMIT),
    )(x.reshape(N, S, C), res.reshape(N, S, C))
    return out.reshape(x.shape)


# ----------------------------------------------------------------------------
# Remaining conv helpers (matmul-based; no big im2col blowups remain)
# ----------------------------------------------------------------------------

def conv3d_im2col(x, w, b=None, stride=1, padding=0, ln=None):
    """General conv via im2col.  Only used for the 7x7x7/stride-2 stem (Cin=1)."""
    N, D, H, W, Cin = x.shape
    kd, kh, kw, _, Cout = w.shape
    xp = jnp.pad(x, ((0, 0), (padding, padding), (padding, padding),
                     (padding, padding), (0, 0))).astype(jnp.bfloat16)
    Do = (D + 2 * padding - kd) // stride + 1
    Ho = (H + 2 * padding - kh) // stride + 1
    Wo = (W + 2 * padding - kw) // stride + 1
    pats = []
    for a in range(kd):
        for bb in range(kh):
            for c in range(kw):
                sl = xp[:, a::stride, bb::stride, c::stride, :][:, :Do, :Ho, :Wo, :]
                pats.append(sl)
    pat = jnp.stack(pats, axis=-2)                       # (N,Do,Ho,Wo,k3,Cin) bf16
    A = pat.reshape(N * Do * Ho * Wo, kd * kh * kw * Cin)
    B = w.reshape(kd * kh * kw * Cin, Cout)
    out = pallas_matmul(A, B, bias=b, ln=ln)
    return out.reshape(N, Do, Ho, Wo, Cout)


def conv2x2_s2(x, w, b=None):
    """2x2x2 conv, stride 2 (non-overlapping): reshape regroup + matmul, no im2col blowup."""
    N, D, H, W, Cin = x.shape
    Cout = w.shape[-1]
    Do, Ho, Wo = D // 2, H // 2, W // 2
    xr = x.reshape(N, Do, 2, Ho, 2, Wo, 2, Cin)
    xr = jnp.transpose(xr, (0, 1, 3, 5, 2, 4, 6, 7)).reshape(N * Do * Ho * Wo, 8 * Cin)
    out = pallas_matmul(xr, w.reshape(8 * Cin, Cout), bias=b)
    return out.reshape(N, Do, Ho, Wo, Cout)


def conv1x1(x, w, b=None):
    N, D, H, W, Cin = x.shape
    Cout = w.shape[-1]
    out = pallas_matmul(x.reshape(-1, Cin), w.reshape(Cin, Cout), bias=b)
    return out.reshape(N, D, H, W, Cout)


def conv_transpose2(x, w):
    """ConvTranspose3d kernel=2 stride=2, no bias. w: (Cin, 2, 2, 2, Cout)."""
    N, D, H, W, Cin = x.shape
    Cout = w.shape[-1]
    y = pallas_matmul(x.reshape(-1, Cin), w.reshape(Cin, 8 * Cout))
    y = y.reshape(N, D, H, W, 2, 2, 2, Cout)
    y = jnp.transpose(y, (0, 1, 4, 2, 5, 3, 6, 7)).reshape(N, 2 * D, 2 * H, 2 * W, Cout)
    return y


# ----------------------------------------------------------------------------
# Network blocks
# ----------------------------------------------------------------------------

def ln_channels(x5d, g, b):          # per-voxel LayerNorm over channels (channels_first LN)
    shp = x5d.shape
    return layernorm2d(x5d.reshape(-1, shp[-1]), g, b).reshape(shp)


def ux_block_fwd(x, p):
    N, D, H, W, C = x.shape
    h = depthwise_conv7(x, p['dw_w'], p['dw_b'])
    out = ux_mlp(h.reshape(-1, C), x.reshape(-1, C), p)    # x + gamma * mlp(LN(dw(x)))
    return out.reshape(N, D, H, W, C)


def backbone_fwd(x, bb, depths):
    outs = []
    # stem conv with the channels-LayerNorm fused into the matmul epilogue
    x = conv3d_im2col(x, bb['stem_w'], bb['stem_b'], stride=2, padding=3,
                      ln=(bb['stem_ln_w'], bb['stem_ln_b']))
    for blk in bb['stage0']:
        x = ux_block_fwd(x, blk)
    outs.append(ln_channels(x, bb['norm0_w'], bb['norm0_b']))
    for i in range(3):
        x = ln_channels(x, bb[f'down{i}_ln_w'], bb[f'down{i}_ln_b'])
        x = conv2x2_s2(x, bb[f'down{i}_w'], bb[f'down{i}_b'])
        for blk in bb[f'stage{i + 1}']:
            x = ux_block_fwd(x, blk)
        outs.append(ln_channels(x, bb[f'norm{i + 1}_w'], bb[f'norm{i + 1}_b']))
    return outs


def unet_res_block(x, p):
    h = conv3x3(x, p['conv1_w'], fuse_in=True, relu=True)   # conv1 + IN + LeakyReLU fused
    h = conv3x3(h, p['conv2_w'])                             # conv2 (IN applied below)
    if 'conv3_w' in p:
        r = conv1x1(x, p['conv3_w'])
        r = instance_norm(r, relu=False)
    else:
        r = x
    return instance_norm_add_lrelu(h, r)     # lrelu(IN(conv2(h)) + residual), fused


def unetr_up_block(x, skip, p):
    up = conv_transpose2(x, p['transp_w'])
    cat = jnp.concatenate([up, skip], axis=-1)     # torch.cat((out, skip), dim=1)
    return unet_res_block(cat, p['res'])


def uxnet_forward(x_ncdhw, P, depths):
    x = jnp.transpose(x_ncdhw, (0, 2, 3, 4, 1)).astype(jnp.float32)   # NCDHW -> NDHWC
    outs = backbone_fwd(x, P['backbone'], depths)
    enc1 = unet_res_block(x, P['encoder1'])
    enc2 = unet_res_block(outs[0], P['encoder2'])
    enc3 = unet_res_block(outs[1], P['encoder3'])
    enc4 = unet_res_block(outs[2], P['encoder4'])
    enc_hidden = unet_res_block(outs[3], P['encoder5'])
    dec3 = unetr_up_block(enc_hidden, enc4, P['decoder5'])
    dec2 = unetr_up_block(dec3, enc3, P['decoder4'])
    dec1 = unetr_up_block(dec2, enc2, P['decoder3'])
    dec0 = unetr_up_block(dec1, enc1, P['decoder2'])
    out = unet_res_block(dec0, P['decoder1'])
    logits = conv1x1(out, P['out_w'], P['out_b'])
    return jnp.transpose(logits, (0, 4, 1, 2, 3))                      # back to NCDHW


# ----------------------------------------------------------------------------
# Deterministic parameter initialization
# ----------------------------------------------------------------------------

def init_params(key, cfg):
    dims, in_ch = cfg['feat_size'], cfg['in_chans']
    hid, out_ch, depths = cfg['hidden_size'], cfg['out_chans'], cfg['depths']
    state = {'key': key}

    def nrm(*shape, scale=0.02):
        state['key'], sub = jax.random.split(state['key'])
        return scale * jax.random.normal(sub, shape, jnp.float32)

    bb = {'stem_w': nrm(7, 7, 7, in_ch, dims[0]), 'stem_b': jnp.zeros((dims[0],)),
          'stem_ln_w': jnp.ones((dims[0],)), 'stem_ln_b': jnp.zeros((dims[0],))}
    for i in range(3):
        bb[f'down{i}_ln_w'] = jnp.ones((dims[i],))
        bb[f'down{i}_ln_b'] = jnp.zeros((dims[i],))
        bb[f'down{i}_w'] = nrm(2, 2, 2, dims[i], dims[i + 1])
        bb[f'down{i}_b'] = jnp.zeros((dims[i + 1],))
    for i in range(4):
        d = dims[i]
        bb[f'stage{i}'] = [dict(
            dw_w=nrm(7, 7, 7, d), dw_b=jnp.zeros((d,)),
            ln_w=jnp.ones((d,)), ln_b=jnp.zeros((d,)),
            pw1_w=nrm(d, 4 * d), pw1_b=jnp.zeros((4 * d,)),
            pw2_w=nrm(4 * d, d), pw2_b=jnp.zeros((d,)),
            gamma=cfg['layer_scale_init_value'] * jnp.ones((d,)),
        ) for _ in range(depths[i])]
        bb[f'norm{i}_w'] = jnp.ones((d,))
        bb[f'norm{i}_b'] = jnp.zeros((d,))

    def res_block_params(cin, cout):
        p = dict(conv1_w=nrm(3, 3, 3, cin, cout), conv2_w=nrm(3, 3, 3, cout, cout))
        if cin != cout:
            p['conv3_w'] = nrm(1, 1, 1, cin, cout)
        return p

    def up_block_params(cin, cout):
        return dict(transp_w=nrm(cin, 2, 2, 2, cout),
                    res=res_block_params(2 * cout, cout))

    P = {'backbone': bb,
         'encoder1': res_block_params(in_ch, dims[0]),
         'encoder2': res_block_params(dims[0], dims[1]),
         'encoder3': res_block_params(dims[1], dims[2]),
         'encoder4': res_block_params(dims[2], dims[3]),
         'encoder5': res_block_params(dims[3], hid),
         'decoder5': up_block_params(hid, dims[3]),
         'decoder4': up_block_params(dims[3], dims[2]),
         'decoder3': up_block_params(dims[2], dims[1]),
         'decoder2': up_block_params(dims[1], dims[0]),
         'decoder1': res_block_params(dims[0], dims[0]),
         'out_w': nrm(1, 1, 1, 48, out_ch),       # UnetOutBlock in_channels=48 (hardcoded in UXNET)
         'out_b': jnp.zeros((out_ch,))}
    return P


# ----------------------------------------------------------------------------

if __name__ == "__main__":
    cfg = dict(in_chans=1, out_chans=13, depths=[1, 1, 1, 1],
               feat_size=[48, 64, 96, 128], hidden_size=192,
               layer_scale_init_value=1e-6)
    key = jax.random.PRNGKey(0)
    pkey, xkey = jax.random.split(key)
    params = init_params(pkey, cfg)
    x = jax.random.normal(xkey, (2, cfg['in_chans'], 16, 16, 16), jnp.float32)

    y = uxnet_forward(x, params, cfg['depths'])
    y = jax.block_until_ready(y)
    assert y.shape == (2, cfg['out_chans'], 16, 16, 16), y.shape
    assert bool(jnp.all(jnp.isfinite(y)))
    print("KERNEL_OK")
</pallas_src>

<mosaic_0001>
module attributes {stable_mosaic.version = 11 : i64} {
  func.func @_mm_ln_kernel(%arg0: i32, %arg1: i32, %arg2: i32, %arg3: memref<128x384xbf16, #tpu.memory_space<vmem>>, %arg4: memref<384x128xbf16, #tpu.memory_space<vmem>>, %arg5: memref<1x128xf32, #tpu.memory_space<vmem>>, %arg6: memref<1x128xf32, #tpu.memory_space<vmem>>, %arg7: memref<1x128xf32, #tpu.memory_space<vmem>>, %arg8: memref<128x128xf32, #tpu.memory_space<vmem>>, %arg9: memref<128x128xf32, #tpu.memory_space<vmem>>) attributes {dimension_semantics = [#tpu.dimension_semantics<parallel>, #tpu.dimension_semantics<parallel>, #tpu.dimension_semantics<arbitrary>], iteration_bounds = array<i64: 8, 1, 1>, scalar_prefetch = 0 : i64, scratch_operands = 1 : i64, tpu.core_type = #tpu.core_type<tc>, window_params = [{transform_indices = @transform_0, window_bounds = array<i64: 128, 384>}, {transform_indices = @transform_1, window_bounds = array<i64: 384, 128>}, {transform_indices = @transform_2, window_bounds = array<i64: 1, 128>}, {transform_indices = @transform_3, window_bounds = array<i64: 1, 128>}, {transform_indices = @transform_4, window_bounds = array<i64: 1, 128>}, {transform_indices = @transform_5, window_bounds = array<i64: 128, 128>}]} {
    %c0_i32 = arith.constant 0 : i32
    %0 = arith.cmpi eq, %arg2, %c0_i32 : i32
    %1 = arith.extui %0 : i1 to i32
    %c0_i32_0 = arith.constant 0 : i32
    %2 = arith.cmpi ne, %1, %c0_i32_0 : i32
    scf.if %2 {
      %cst_10 = arith.constant 0.000000e+00 : f32
      %12 = vector.broadcast %cst_10 : f32 to vector<128x128xf32>
      %c0_11 = arith.constant 0 : index
      %c0_12 = arith.constant 0 : index
      %13 = vector.load %arg9[%c0_11, %c0_12] : memref<128x128xf32, #tpu.memory_space<vmem>>, vector<128x128xf32>
      tpu.vector_store %arg9[%c0_11, %c0_12], %12 {strides = array<i32>} : memref<128x128xf32, #tpu.memory_space<vmem>>, vector<128x128xf32>,
    } else {
    }
    %c0 = arith.constant 0 : index
    %c0_1 = arith.constant 0 : index
    %3 = vector.load %arg9[%c0, %c0_1] : memref<128x128xf32, #tpu.memory_space<vmem>>, vector<128x128xf32>
    %c0_2 = arith.constant 0 : index
    %c0_3 = arith.constant 0 : index
    %4 = vector.load %arg3[%c0_2, %c0_3] : memref<128x384xbf16, #tpu.memory_space<vmem>>, vector<128x384xbf16>
    %c0_4 = arith.constant 0 : index
    %c0_5 = arith.constant 0 : index
    %5 = vector.load %arg4[%c0_4, %c0_5] : memref<384x128xbf16, #tpu.memory_space<vmem>>, vector<384x128xbf16>
    %cst = arith.constant dense<0.000000e+00> : vector<128x128xf32>
    %6 = tpu.matmul %4, %5, %cst {dimension_numbers = #tpu.dot_dimension_numbers<[1], [0], [0], [1], [0, 0, 1, 1], [], []>} : vector<128x384xbf16>, vector<384x128xbf16>, vector<128x128xf32> -> vector<128x128xf32>
    %7 = arith.addf %3, %6 : vector<128x128xf32>
    %c0_6 = arith.constant 0 : index
    %c0_7 = arith.constant 0 : index
    %8 = vector.load %arg9[%c0_6, %c0_7] : memref<128x128xf32, #tpu.memory_space<vmem>>, vector<128x128xf32>
    tpu.vector_store %arg9[%c0_6, %c0_7], %7 {strides = array<i32>} : memref<128x128xf32, #tpu.memory_space<vmem>>, vector<128x128xf32>,
    %c0_i32_8 = arith.constant 0 : i32
    %9 = arith.cmpi eq, %arg2, %c0_i32_8 : i32
    %10 = arith.extui %9 : i1 to i32
    %c0_i32_9 = arith.constant 0 : i32
    %11 = arith.cmpi ne, %10, %c0_i32_9 : i32
    scf.if %11 {
      %c0_10 = arith.constant 0 : index
      %c0_11 = arith.constant 0 : index
      %12 = vector.load %arg9[%c0_10, %c0_11] : memref<128x128xf32, #tpu.memory_space<vmem>>, vector<128x128xf32>
      %c0_12 = arith.constant 0 : index
      %c0_13 = arith.constant 0 : index
      %13 = vector.load %arg5[%c0_12, %c0_13] : memref<1x128xf32, #tpu.memory_space<vmem>>, vector<1x128xf32>
      %14 = vector.broadcast %13 : vector<1x128xf32> to vector<128x128xf32>
      %15 = arith.addf %12, %14 : vector<128x128xf32>
      %16 = tpu.iota {dimensions = array<i32: 1>} : vector<128x128xi32>
      %c48_i32 = arith.constant 48 : i32
      %17 = vector.broadcast %c48_i32 : i32 to vector<128x128xi32>
      %18 = arith.cmpi slt, %16, %17 : vector<128x128xi32>
      %cst_14 = arith.constant 0.000000e+00 : f32
      %19 = vector.broadcast %cst_14 : f32 to vector<128x128xf32>
      %20 = arith.select %18, %15, %19 : vector<128x128xi1>, vector<128x128xf32>
      %cst_15 = arith.constant dense<0.000000e+00> : vector<128xf32>
      %21 = vector.multi_reduction <add>, %20, %cst_15 [1] : vector<128x128xf32> to vector<128xf32>
      %22 = vector.shape_cast %21 : vector<128xf32> to vector<128x1xf32>
      %cst_16 = arith.constant 0.020833334 : f32
      %23 = vector.broadcast %cst_16 : f32 to vector<128x1xf32>
      %24 = arith.mulf %22, %23 : vector<128x1xf32>
      %25 = vector.broadcast %24 : vector<128x1xf32> to vector<128x128xf32>
      %26 = arith.subf %15, %25 : vector<128x128xf32>
      %cst_17 = arith.constant 0.000000e+00 : f32
      %27 = vector.broadcast %cst_17 : f32 to vector<128x128xf32>
      %28 = arith.select %18, %26, %27 : vector<128x128xi1>, vector<128x128xf32>
      %29 = arith.mulf %28, %28 : vector<128x128xf32>
      %cst_18 = arith.constant dense<0.000000e+00> : vector<128xf32>
      %30 = vector.multi_reduction <add>, %29, %cst_18 [1] : vector<128x128xf32> to vector<128xf32>
      %31 = vector.shape_cast %30 : vector<128xf32> to vector<128x1xf32>
      %cst_19 = arith.constant 0.020833334 : f32
      %32 = vector.broadcast %cst_19 : f32 to vector<128x1xf32>
      %33 = arith.mulf %31, %32 : vector<128x1xf32>
      %34 = vector.broadcast %24 : vector<128x1xf32> to vector<128x128xf32>
      %35 = arith.subf %15, %34 : vector<128x128xf32>
      %cst_20 = arith.constant 9.99999997E-7 : f32
      %36 = vector.broadcast %cst_20 : f32 to vector<128x1xf32>
      %37 = arith.addf %33, %36 : vector<128x1xf32>
      %38 = math.rsqrt %37 : vector<128x1xf32>
      %39 = vector.broadcast %38 : vector<128x1xf32> to vector<128x128xf32>
      %40 = arith.mulf %35, %39 : vector<128x128xf32>
      %c0_21 = arith.constant 0 : index
      %c0_22 = arith.constant 0 : index
      %41 = vector.load %arg6[%c0_21, %c0_22] : memref<1x128xf32, #tpu.memory_space<vmem>>, vector<1x128xf32>
      %42 = vector.broadcast %41 : vector<1x128xf32> to vector<128x128xf32>
      %43 = arith.mulf %40, %42 : vector<128x128xf32>
      %c0_23 = arith.constant 0 : index
      %c0_24 = arith.constant 0 : index
      %44 = vector.load %arg7[%c0_23, %c0_24] : memref<1x128xf32, #tpu.memory_space<vmem>>, vector<1x128xf32>
      %45 = vector.broadcast %44 : vector<1x128xf32> to vector<128x128xf32>
      %46 = arith.addf %43, %45 : vector<128x128xf32>
      %c0_25 = arith.constant 0 : index
      %c0_26 = arith.constant 0 : index
      %47 = vector.load %arg8[%c0_25, %c0_26] : memref<128x128xf32, #tpu.memory_space<vmem>>, vector<128x128xf32>
      tpu.vector_store %arg8[%c0_25, %c0_26], %46 {strides = array<i32>} : memref<128x128xf32, #tpu.memory_space<vmem>>, vector<128x128xf32>,
    } else {
    }
    return
  }
  func.func @transform_0(%arg0: i32, %arg1: i32, %arg2: i32) -> (i32, i32) {
    %c0_i32 = arith.constant 0 : i32
    return %arg0, %arg2 : i32, i32
  }
  func.func @transform_1(%arg0: i32, %arg1: i32, %arg2: i32) -> (i32, i32) {
    %c0_i32 = arith.constant 0 : i32
    return %arg2, %arg1 : i32, i32
  }
  func.func @transform_2(%arg0: i32, %arg1: i32, %arg2: i32) -> (i32, i32) {
    %c0_i32 = arith.constant 0 : i32
    %c0_i32_0 = arith.constant 0 : i32
    return %c0_i32, %arg1 : i32, i32
  }
  func.func @transform_3(%arg0: i32, %arg1: i32, %arg2: i32) -> (i32, i32) {
    %c0_i32 = arith.constant 0 : i32
    %c0_i32_0 = arith.constant 0 : i32
    return %c0_i32, %arg1 : i32, i32
  }
  func.func @transform_4(%arg0: i32, %arg1: i32, %arg2: i32) -> (i32, i32) {
    %c0_i32 = arith.constant 0 : i32
    %c0_i32_0 = arith.constant 0 : i32
    return %c0_i32, %arg1 : i32, i32
  }
  func.func @transform_5(%arg0: i32, %arg1: i32, %arg2: i32) -> (i32, i32) {
    %c0_i32 = arith.constant 0 : i32
    return %arg0, %arg1 : i32, i32
  }
}

</mosaic_0001>

<llo_original>
// kernel: tpu_custom_call.1
$region0: #{tpu_custom_call.1}
  #allocation0 [shape = 'u32[]', space=smem, size = 0x4, offset = 0x4, fixed_abs, tag = 'smem constant byte address 0x4 - core index']
  #allocation1 [shape = 'u32[144,128]{1,0:T(1,128)}', space=vmem, size = 0x12000, scoped, tag = 'internal scratch']
  #allocation2 [shape = 'f32[128,128]{1,0:T(8,128)}', space=vmem, size = 0x10000, scoped, tag = 'scratch operand']
  %s0 = inlined_call_operand.hbm [shape: bf16[1024,384], index: 0, kind: input, shape index: {}]
  %s1 = inlined_call_operand.hbm [shape: bf16[384,128], index: 1, kind: input, shape index: {}]
  %s2 = inlined_call_operand.hbm [shape: f32[1,128], index: 2, kind: input, shape index: {}]
  %s3 = inlined_call_operand.hbm [shape: f32[1,128], index: 3, kind: input, shape index: {}]
  %s4 = inlined_call_operand.hbm [shape: f32[1,128], index: 4, kind: input, shape index: {}]
  %s5 = inlined_call_operand.hbm [shape: f32[1024,128], index: 5, kind: output, shape index: {}]
  %s6 = sld [smem:[#allocation0]]
  $region81: #{tpu_custom_call.1} parent=0
    _
  %s8 = ssub.s32 1, %s6
  %s9 = scalar_select 0, %s8, %s6
  $region1: #{tpu_custom_call.1} parent=0
    #allocation3 [shape = 'u8[196608]{0}', space=vmem, size = 0x30000, scoped, tag = 'input window, operand 0']
    #allocation4 [shape = 's32[2]{0}', space=sflag, size = 0x8, scoped, tag = 'scoped memory for tpu_custom_call.1']
    #allocation5 [shape = 's32[2]{0}', space=sflag, size = 0x8, scoped, tag = 'scoped memory for tpu_custom_call.1']
    #allocation6 [shape = 'u8[98304]{0}', space=vmem, size = 0x18000, scoped, tag = 'input window, operand 1, single buffered']
    #allocation7 [shape = 's32[1]{0}', space=sflag, size = 0x4, scoped, tag = 'scoped memory for tpu_custom_call.1']
    #allocation8 [shape = 'u8[512]{0}', space=vmem, size = 0x400, scoped, tag = 'input window, operand 2, single buffered']
    #allocation9 [shape = 'u8[512]{0}', space=vmem, size = 0x400, scoped, tag = 'input window, operand 3, single buffered']
    #allocation10 [shape = 's32[1]{0}', space=sflag, size = 0x4, scoped, tag = 'scoped memory for tpu_custom_call.1']
    #allocation11 [shape = 'u8[512]{0}', space=vmem, size = 0x400, scoped, tag = 'input window, operand 4, single buffered']
    #allocation12 [shape = 'u8[131072]{0}', space=vmem, size = 0x20000, scoped, tag = 'output window, operand 0']
    %10 = vsyncpa [#allocation4], 0
    %s11 = scalar_lea.sflag [#allocation4], 1
    %12 = vsyncpa %s11, 0
    %13 = vsyncpa [#allocation7], 0
    %14 = vsyncpa [#allocation10], 0
    %15 = vsyncpa [#allocation5], 0
    %s16 = scalar_lea.sflag [#allocation5], 1
    %17 = vsyncpa %s16, 0
    loop: start=0, step=1, limit=10
    $region2: #{tpu_custom_call.1} parent=1 // loop_pre_header
      _
    $region3: #{tpu_custom_call.1} parent=1 // loop_header
      %s19 = sphi 0, %s23
      %p20 = scmp.ge.s32.totalorder %s19, 10
      %s26 = sphi 0, %s45
      %s27 = sphi 0, %s41
      %s28 = sphi 0, %s37
      %s29 = sphi 0, %s26
      %s30 = sphi 0, %s27
      %s31 = sphi 0, %s28
      %s32 = sphi 0, %s29
      %s33 = sphi 0, %s30
      %s34 = sphi 0, %s31
      %s50 = sphi 0, %s52
      %s53 = sphi 0, %s50
      %s54 = sphi 0, %s53
      %s70 = sphi 0, %s54
      %s78 = sphi 0, %s80
      %s81 = sphi 0, %s78
      %s82 = sphi 0, %s81
      %s98 = sphi 0, %s82
      %s104 = sphi 0, %s106
      %s107 = sphi 0, %s104
      %s108 = sphi 0, %s107
      %s124 = sphi 0, %s108
      %s130 = sphi 0, %s132
      %s133 = sphi 0, %s130
      %s134 = sphi 0, %s133
      %s150 = sphi 0, %s134
      %s156 = sphi 0, %s158
      %s159 = sphi 0, %s156
      %s160 = sphi 0, %s159
      %s176 = sphi 0, %s160
      %s184 = sphi 0, %s186
      %s187 = sphi 0, %s184
      %s188 = sphi 0, %s187
      %s204 = sphi 0, %s188
    $region4: #{tpu_custom_call.1} parent=1 // loop_header_branch
      %22 = sbr.rel (%p20) target = $region8
    $region5: #{tpu_custom_call.1} parent=1 // loop_body
      %s24 = ssub.s32 %s19, 1
      %s25 = ssub.s32 %s19, 2
      %s35 = sadd.s32 1, %s28
      %p36 = scmp.ge.s32.totalorder %s35, 1
      %s37 = scalar_select %p36, 0, %s35
      %s38 = sadd.s32 1, %s27
      %s39 = scalar_select %p36, %s38, %s27
      %p40 = scmp.ge.s32.totalorder %s39, 1
      %s41 = scalar_select %p40, 0, %s39
      %s42 = sadd.s32 1, %s26
      %s43 = scalar_select %p40, %s42, %s26
      %p44 = scmp.ge.s32.totalorder %s43, 8
      %s45 = scalar_select %p44, 0, %s43
      %s46 = ssub.s32 %s26, %s45
      %s47 = ssub.s32 %s28, %s37
      %s48 = sor.u32 %s46, %s47
      %p49 = scmp.eq.s32.totalorder %s48, 0
      %s51 = sadd.s32 %s50, 1
      %s52 = scalar_select %p49, %s50, %s51
      %p55 = pneg %p49
      %p56 = scmp.eq.s32.totalorder %s19, 7
      %p57 = por %p55, %p56
      %p58 = scmp.ne.s32.totalorder %s50, %s53
      %p59 = scmp.eq.s32.totalorder %s19, 0
      %p60 = por %p58, %p59
      %p61 = scmp.ne.s32.totalorder %s50, %s53
      %p62 = scmp.eq.s32.totalorder %s24, 7
      %p63 = por %p61, %p62
      %p64 = scmp.ne.s32.totalorder %s53, %s54
      %p65 = scmp.eq.s32.totalorder %s24, 0
      %p66 = por %p64, %p65
      %p67 = scmp.ne.s32.totalorder %s53, %s54
      %p68 = scmp.eq.s32.totalorder %s25, 7
      %p69 = por %p67, %p68
      %p71 = scmp.ne.s32.totalorder %s54, %s70
      %p72 = scmp.eq.s32.totalorder %s25, 0
      %p73 = por %p71, %p72
      %s74 = ssub.s32 %s28, %s37
      %s75 = ssub.s32 %s27, %s41
      %s76 = sor.u32 %s74, %s75
      %p77 = scmp.eq.s32.totalorder %s76, 0
      %s79 = sadd.s32 %s78, 1
      %s80 = scalar_select %p77, %s78, %s79
      %p83 = pneg %p77
      %p84 = scmp.eq.s32.totalorder %s19, 7
      %p85 = por %p83, %p84
      %p86 = scmp.ne.s32.totalorder %s78, %s81
      %p87 = scmp.eq.s32.totalorder %s19, 0
      %p88 = por %p86, %p87
      %p89 = scmp.ne.s32.totalorder %s78, %s81
      %p90 = scmp.eq.s32.totalorder %s24, 7
      %p91 = por %p89, %p90
      %p92 = scmp.ne.s32.totalorder %s81, %s82
      %p93 = scmp.eq.s32.totalorder %s24, 0
      %p94 = por %p92, %p93
      %p95 = scmp.ne.s32.totalorder %s81, %s82
      %p96 = scmp.eq.s32.totalorder %s25, 7
      %p97 = por %p95, %p96
      %p99 = scmp.ne.s32.totalorder %s82, %s98
      %p100 = scmp.eq.s32.totalorder %s25, 0
      %p101 = por %p99, %p100
      %s102 = ssub.s32 %s27, %s41
      %p103 = scmp.eq.s32.totalorder %s102, 0
      %s105 = sadd.s32 %s104, 1
      %s106 = scalar_select %p103, %s104, %s105
      %p109 = pneg %p103
      %p110 = scmp.eq.s32.totalorder %s19, 7
      %p111 = por %p109, %p110
      %p112 = scmp.ne.s32.totalorder %s104, %s107
      %p113 = scmp.eq.s32.totalorder %s19, 0
      %p114 = por %p112, %p113
      %p115 = scmp.ne.s32.totalorder %s104, %s107
      %p116 = scmp.eq.s32.totalorder %s24, 7
      %p117 = por %p115, %p116
      %p118 = scmp.ne.s32.totalorder %s107, %s108
      %p119 = scmp.eq.s32.totalorder %s24, 0
      %p120 = por %p118, %p119
      %p121 = scmp.ne.s32.totalorder %s107, %s108
      %p122 = scmp.eq.s32.totalorder %s25, 7
      %p123 = por %p121, %p122
      %p125 = scmp.ne.s32.totalorder %s108, %s124
      %p126 = scmp.eq.s32.totalorder %s25, 0
      %p127 = por %p125, %p126
      %s128 = ssub.s32 %s27, %s41
      %p129 = scmp.eq.s32.totalorder %s128, 0
      %s131 = sadd.s32 %s130, 1
      %s132 = scalar_select %p129, %s130, %s131
      %p135 = pneg %p129
      %p136 = scmp.eq.s32.totalorder %s19, 7
      %p137 = por %p135, %p136
      %p138 = scmp.ne.s32.totalorder %s130, %s133
      %p139 = scmp.eq.s32.totalorder %s19, 0
      %p140 = por %p138, %p139
      %p141 = scmp.ne.s32.totalorder %s130, %s133
      %p142 = scmp.eq.s32.totalorder %s24, 7
      %p143 = por %p141, %p142
      %p144 = scmp.ne.s32.totalorder %s133, %s134
      %p145 = scmp.eq.s32.totalorder %s24, 0
      %p146 = por %p144, %p145
      %p147 = scmp.ne.s32.totalorder %s133, %s134
      %p148 = scmp.eq.s32.totalorder %s25, 7
      %p149 = por %p147, %p148
      %p151 = scmp.ne.s32.totalorder %s134, %s150
      %p152 = scmp.eq.s32.totalorder %s25, 0
      %p153 = por %p151, %p152
      %s154 = ssub.s32 %s27, %s41
      %p155 = scmp.eq.s32.totalorder %s154, 0
      %s157 = sadd.s32 %s156, 1
      %s158 = scalar_select %p155, %s156, %s157
      %p161 = pneg %p155
      %p162 = scmp.eq.s32.totalorder %s19, 7
      %p163 = por %p161, %p162
      %p164 = scmp.ne.s32.totalorder %s156, %s159
      %p165 = scmp.eq.s32.totalorder %s19, 0
      %p166 = por %p164, %p165
      %p167 = scmp.ne.s32.totalorder %s156, %s159
      %p168 = scmp.eq.s32.totalorder %s24, 7
      %p169 = por %p167, %p168
      %p170 = scmp.ne.s32.totalorder %s159, %s160
      %p171 = scmp.eq.s32.totalorder %s24, 0
      %p172 = por %p170, %p171
      %p173 = scmp.ne.s32.totalorder %s159, %s160
      %p174 = scmp.eq.s32.totalorder %s25, 7
      %p175 = por %p173, %p174
      %p177 = scmp.ne.s32.totalorder %s160, %s176
      %p178 = scmp.eq.s32.totalorder %s25, 0
      %p179 = por %p177, %p178
      %s180 = ssub.s32 %s26, %s45
      %s181 = ssub.s32 %s27, %s41
      %s182 = sor.u32 %s180, %s181
      %p183 = scmp.eq.s32.totalorder %s182, 0
      %s185 = sadd.s32 %s184, 1
      %s186 = scalar_select %p183, %s184, %s185
      %p189 = pneg %p183
      %p190 = scmp.eq.s32.totalorder %s19, 7
      %p191 = por %p189, %p190
      %p192 = scmp.ne.s32.totalorder %s184, %s187
      %p193 = scmp.eq.s32.totalorder %s19, 0
      %p194 = por %p192, %p193
      %p195 = scmp.ne.s32.totalorder %s184, %s187
      %p196 = scmp.eq.s32.totalorder %s24, 7
      %p197 = por %p195, %p196
      %p198 = scmp.ne.s32.totalorder %s187, %s188
      %p199 = scmp.eq.s32.totalorder %s24, 0
      %p200 = por %p198, %p199
      %p201 = scmp.ne.s32.totalorder %s187, %s188
      %p202 = scmp.eq.s32.totalorder %s25, 7
      %p203 = por %p201, %p202
      %p205 = scmp.ne.s32.totalorder %s188, %s204
      %p206 = scmp.eq.s32.totalorder %s25, 0
      %p207 = por %p205, %p206
      %p208 = scmp.le.s32.totalorder 1, %s19
      %p209 = scmp.lt.s32.totalorder %s19, 9
      %p210 = pnand %p208, %p209
      %p211 = pneg %p210
      // Predicated region
      $region9: #{tpu_custom_call.1} parent=5 // pred_check
        _
      $region10: #{tpu_custom_call.1} parent=5 // pred_check_branch
        %213 = sbr.rel (%p210) target = $region12
      $region11: #{tpu_custom_call.1} parent=5 // pred_region
        %s214 = ssub.s32 %s19, 1
        // Predicated region
        $region13: #{tpu_custom_call.1} parent=11 // pred_check
          %p215 = pneg %p94
        $region14: #{tpu_custom_call.1} parent=11 // pred_check_branch
          %217 = sbr.rel (%p215) target = $region16
        $region15: #{tpu_custom_call.1} parent=11 // pred_region
          %s218 = smul.u32 48, %s31
          %s220 = ssub.s32 3072, 3072
          %221 = vsyncadd [#allocation7], %s220
          %s222 = sadd.s32 %s30, %s218
          %s223 = smul.addr %s222, 64
          %s224 = scalar_lea.hbm %s1, %s223
          %s225 = sshll.u32 [#allocation6], 4
          %s226 = int_to_ptr.vmem [resolvable:$true] %s225
          %231 = dma.hbm_to_vmem [thread:$0]  %s224, 3072, %s226, [#allocation7], 64, 64, 4
        $region16: #{tpu_custom_call.1} parent=11 // pred_fallthru
          _
        // Predicated region
        $region17: #{tpu_custom_call.1} parent=11 // pred_check
          %p232 = pneg %p120
        $region18: #{tpu_custom_call.1} parent=11 // pred_check_branch
          %234 = sbr.rel (%p232) target = $region20
        $region19: #{tpu_custom_call.1} parent=11 // pred_region
          %s236 = ssub.s32 16, 16
          %237 = vsyncadd [#allocation7], %s236
          %s238 = smul.addr %s30, 16
          %s239 = scalar_lea.hbm %s2, %s238
          %s241 = sshll.u32 [#allocation8], 4
          %s242 = int_to_ptr.vmem [resolvable:$true] %s241
          %244 = dma.hbm_to_vmem [thread:$0]  %s239, 16, %s242, [#allocation7]
        $region20: #{tpu_custom_call.1} parent=11 // pred_fallthru
          _
        // Predicated region
        $region21: #{tpu_custom_call.1} parent=11 // pred_check
          %p245 = pneg %p146
        $region22: #{tpu_custom_call.1} parent=11 // pred_check_branch
          %247 = sbr.rel (%p245) target = $region24
        $region23: #{tpu_custom_call.1} parent=11 // pred_region
          %s249 = ssub.s32 16, 16
          %250 = vsyncadd [#allocation10], %s249
          %s251 = smul.addr %s30, 16
          %s252 = scalar_lea.hbm %s3, %s251
          %s254 = sshll.u32 [#allocation9], 4
          %s255 = int_to_ptr.vmem [resolvable:$true] %s254
          %257 = dma.hbm_to_vmem [thread:$0]  %s252, 16, %s255, [#allocation10]
        $region24: #{tpu_custom_call.1} parent=11 // pred_fallthru
          _
        // Predicated region
        $region25: #{tpu_custom_call.1} parent=11 // pred_check
          %p258 = pneg %p172
        $region26: #{tpu_custom_call.1} parent=11 // pred_check_branch
          %260 = sbr.rel (%p258) target = $region28
        $region27: #{tpu_custom_call.1} parent=11 // pred_region
          %s262 = ssub.s32 16, 16
          %263 = vsyncadd [#allocation10], %s262
          %s264 = smul.addr %s30, 16
          %s265 = scalar_lea.hbm %s4, %s264
          %s267 = sshll.u32 [#allocation11], 4
          %s268 = int_to_ptr.vmem [resolvable:$true] %s267
          %270 = dma.hbm_to_vmem [thread:$0]  %s265, 16, %s268, [#allocation10]
        $region28: #{tpu_custom_call.1} parent=11 // pred_fallthru
          _
      $region12: #{tpu_custom_call.1} parent=5 // pred_fallthru
        _
      %p271 = scmp.lt.s32.totalorder %s19, 8
      // Predicated region
      $region29: #{tpu_custom_call.1} parent=5 // pred_check
        %p272 = pneg %p271
      $region30: #{tpu_custom_call.1} parent=5 // pred_check_branch
        %274 = sbr.rel (%p272) target = $region32
      $region31: #{tpu_custom_call.1} parent=5 // pred_region
        // Predicated region
        $region33: #{tpu_custom_call.1} parent=31 // pred_check
          %p275 = pneg %p60
        $region34: #{tpu_custom_call.1} parent=31 // pred_check_branch
          %277 = sbr.rel (%p275) target = $region36
        $region35: #{tpu_custom_call.1} parent=31 // pred_region
          %s278 = sand.u32 %s50, 1
          %s279 = scalar_lea.sflag [#allocation4], %s278
          %s280 = sand.u32 %s50, 1
          %s281 = smul.addr %s280, 192
          %s282 = scalar_lea.vmem [#allocation3], %s281
          %s283 = smul.u32 16, %s26
          %s284 = smul.u32 3, %s28
          %s286 = ssub.s32 3072, 3072
          %287 = vsyncadd %s279, %s286
          %s288 = smul.addr %s283, 3
          %s289 = sadd.s32 %s284, %s288
          %s290 = smul.addr %s289, 64
          %s291 = scalar_lea.hbm %s0, %s290
          %s292 = sshll.u32 %s282, 4
          %s293 = int_to_ptr.vmem [resolvable:$true] %s292
          %298 = dma.hbm_to_vmem [thread:$0]  %s291, 3072, %s293, %s279, 192, 192, 12
        $region36: #{tpu_custom_call.1} parent=31 // pred_fallthru
          _
      $region32: #{tpu_custom_call.1} parent=5 // pred_fallthru
        _
      %p299 = scmp.le.s32.totalorder 1, %s19
      %p300 = scmp.lt.s32.totalorder %s19, 9
      %p301 = pnand %p299, %p300
      %p302 = pneg %p301
      // Predicated region
      $region37: #{tpu_custom_call.1} parent=5 // pred_check
        _
      $region38: #{tpu_custom_call.1} parent=5 // pred_check_branch
        %304 = sbr.rel (%p301) target = $region40
      $region39: #{tpu_custom_call.1} parent=5 // pred_region
        %s305 = ssub.s32 %s19, 1
        %s306 = sand.u32 %s53, 1
        %s307 = scalar_lea.sflag [#allocation4], %s306
        %s308 = sand.u32 %s53, 1
        %s309 = smul.addr %s308, 192
        %s310 = scalar_lea.vmem [#allocation3], %s309
        // Predicated region
        $region41: #{tpu_custom_call.1} parent=39 // pred_check
          %p311 = pneg %p66
        $region42: #{tpu_custom_call.1} parent=39 // pred_check_branch
          %313 = sbr.rel (%p311) target = $region44
        $region43: #{tpu_custom_call.1} parent=39 // pred_region
          %314 = dma.done %s307, 3072
        $region44: #{tpu_custom_call.1} parent=39 // pred_fallthru
          _
        // Predicated region
        $region45: #{tpu_custom_call.1} parent=39 // pred_check
          %p315 = pneg %p94
        $region46: #{tpu_custom_call.1} parent=39 // pred_check_branch
          %317 = sbr.rel (%p315) target = $region48
        $region47: #{tpu_custom_call.1} parent=39 // pred_region
          %318 = dma.done [#allocation7], 3072
        $region48: #{tpu_custom_call.1} parent=39 // pred_fallthru
          _
        // Predicated region
        $region49: #{tpu_custom_call.1} parent=39 // pred_check
          %p319 = pneg %p120
        $region50: #{tpu_custom_call.1} parent=39 // pred_check_branch
          %321 = sbr.rel (%p319) target = $region52
        $region51: #{tpu_custom_call.1} parent=39 // pred_region
          %322 = dma.done [#allocation7], 16
        $region52: #{tpu_custom_call.1} parent=39 // pred_fallthru
          _
        // Predicated region
        $region53: #{tpu_custom_call.1} parent=39 // pred_check
          %p323 = pneg %p146
        $region54: #{tpu_custom_call.1} parent=39 // pred_check_branch
          %325 = sbr.rel (%p323) target = $region56
        $region55: #{tpu_custom_call.1} parent=39 // pred_region
          %326 = dma.done [#allocation10], 16
        $region56: #{tpu_custom_call.1} parent=39 // pred_fallthru
          _
        // Predicated region
        $region57: #{tpu_custom_call.1} parent=39 // pred_check
          %p327 = pneg %p172
        $region58: #{tpu_custom_call.1} parent=39 // pred_check_branch
          %329 = sbr.rel (%p327) target = $region60
        $region59: #{tpu_custom_call.1} parent=39 // pred_region
          %330 = dma.done [#allocation10], 16
        $region60: #{tpu_custom_call.1} parent=39 // pred_fallthru
          _
        %s331 = sand.u32 %s53, 1
        %s332 = scalar_lea.sflag [#allocation4], %s331
        %s333 = sand.u32 %s53, 1
        %s334 = smul.addr %s333, 192
        %s335 = scalar_lea.vmem [#allocation3], %s334
        %p336 = pneg %p66
        %p337 = pneg %p63
        %p338 = pneg %p94
        %p339 = pneg %p91
        %p340 = pneg %p120
        %p341 = pneg %p117
        %p342 = pneg %p146
        %p343 = pneg %p143
        %p344 = pneg %p172
        %p345 = pneg %p169
        %p346 = pneg %p200
        %p347 = pneg %p197
        %s348 = sand.u32 %s187, 1
        %s349 = scalar_lea.sflag [#allocation5], %s348
        %s350 = sand.u32 %s187, 1
        %s351 = smul.addr %s350, 128
        %s352 = scalar_lea.vmem [#allocation12], %s351
        %s353 = smul.u32 16, %s29
        %s354 = smul.u32 3, %s31
        %s355 = smul.u32 48, %s31
        %s356 = smul.u32 16, %s29
        %p358 = scmp.eq.s32.totalorder %s31, 0
        // Predicated region
        $region61: #{tpu_custom_call.1} parent=39 // pred_check
          %p359 = pneg %p358
        $region62: #{tpu_custom_call.1} parent=39 // pred_check_branch
          %361 = sbr.rel (%p359) target = $region64
        $region63: #{tpu_custom_call.1} parent=39 // pred_region
          %362 = vst [vmem:[#allocation2] sm:$0xff] 0.0
          %363 = vst [vmem:[#allocation2 + $0x8] sm:$0xff] 0.0
          %364 = vst [vmem:[#allocation2 + $0x10] sm:$0xff] 0.0
          %365 = vst [vmem:[#allocation2 + $0x18] sm:$0xff] 0.0
          %366 = vst [vmem:[#allocation2 + $0x20] sm:$0xff] 0.0
          %367 = vst [vmem:[#allocation2 + $0x28] sm:$0xff] 0.0
          %368 = vst [vmem:[#allocation2 + $0x30] sm:$0xff] 0.0
          %369 = vst [vmem:[#allocation2 + $0x38] sm:$0xff] 0.0
          %370 = vst [vmem:[#allocation2 + $0x40] sm:$0xff] 0.0
          %371 = vst [vmem:[#allocation2 + $0x48] sm:$0xff] 0.0
          %372 = vst [vmem:[#allocation2 + $0x50] sm:$0xff] 0.0
          %373 = vst [vmem:[#allocation2 + $0x58] sm:$0xff] 0.0
          %374 = vst [vmem:[#allocation2 + $0x60] sm:$0xff] 0.0
          %375 = vst [vmem:[#allocation2 + $0x68] sm:$0xff] 0.0
          %376 = vst [vmem:[#allocation2 + $0x70] sm:$0xff] 0.0
          %377 = vst [vmem:[#allocation2 + $0x78] sm:$0xff] 0.0
        $region64: #{tpu_custom_call.1} parent=39 // pred_fallthru
          _
        %v378 = vld [vmem:[#allocation2] sm:$0xff]
        %v379 = vld [vmem:[#allocation2 + $0x8] sm:$0xff]
        %v380 = vld [vmem:[#allocation2 + $0x10] sm:$0xff]
        %v381 = vld [vmem:[#allocation2 + $0x18] sm:$0xff]
        %v382 = vld [vmem:[#allocation2 + $0x20] sm:$0xff]
        %v383 = vld [vmem:[#allocation2 + $0x28] sm:$0xff]
        %v384 = vld [vmem:[#allocation2 + $0x30] sm:$0xff]
        %v385 = vld [vmem:[#allocation2 + $0x38] sm:$0xff]
        %v386 = vld [vmem:[#allocation2 + $0x40] sm:$0xff]
        %v387 = vld [vmem:[#allocation2 + $0x48] sm:$0xff]
        %v388 = vld [vmem:[#allocation2 + $0x50] sm:$0xff]
        %v389 = vld [vmem:[#allocation2 + $0x58] sm:$0xff]
        %v390 = vld [vmem:[#allocation2 + $0x60] sm:$0xff]
        %v391 = vld [vmem:[#allocation2 + $0x68] sm:$0xff]
        %v392 = vld [vmem:[#allocation2 + $0x70] sm:$0xff]
        %v393 = vld [vmem:[#allocation2 + $0x78] sm:$0xff]
        %v394 = vld [vmem:[%s310] sm:$0xff]
        %v395 = vld [vmem:[%s310 + $0x8] sm:$0xf]
        %v396 = vld [vmem:[%s310 + $0xc] sm:$0xff]
        %v397 = vld [vmem:[%s310 + $0x14] sm:$0xf]
        %v398 = vld [vmem:[%s310 + $0x18] sm:$0xff]
        %v399 = vld [vmem:[%s310 + $0x20] sm:$0xf]
        %v400 = vld [vmem:[%s310 + $0x24] sm:$0xff]
        %v401 = vld [vmem:[%s310 + $0x2c] sm:$0xf]
        %v402 = vld [vmem:[%s310 + $0x30] sm:$0xff]
        %v403 = vld [vmem:[%s310 + $0x38] sm:$0xf]
        %v404 = vld [vmem:[%s310 + $0x3c] sm:$0xff]
        %v405 = vld [vmem:[%s310 + $0x44] sm:$0xf]
        %v406 = vld [vmem:[%s310 + $0x48] sm:$0xff]
        %v407 = vld [vmem:[%s310 + $0x50] sm:$0xf]
        %v408 = vld [vmem:[%s310 + $0x54] sm:$0xff]
        %v409 = vld [vmem:[%s310 + $0x5c] sm:$0xf]
        %v410 = vld [vmem:[%s310 + $0x60] sm:$0xff]
        %v411 = vld [vmem:[%s310 + $0x68] sm:$0xf]
        %v412 = vld [vmem:[%s310 + $0x6c] sm:$0xff]
        %v413 = vld [vmem:[%s310 + $0x74] sm:$0xf]
        %v414 = vld [vmem:[%s310 + $0x78] sm:$0xff]
        %v415 = vld [vmem:[%s310 + $0x80] sm:$0xf]
        %v416 = vld [vmem:[%s310 + $0x84] sm:$0xff]
        %v417 = vld [vmem:[%s310 + $0x8c] sm:$0xf]
        %v418 = vld [vmem:[%s310 + $0x90] sm:$0xff]
        %v419 = vld [vmem:[%s310 + $0x98] sm:$0xf]
        %v420 = vld [vmem:[%s310 + $0x9c] sm:$0xff]
        %v421 = vld [vmem:[%s310 + $0xa4] sm:$0xf]
        %v422 = vld [vmem:[%s310 + $0xa8] sm:$0xff]
        %v423 = vld [vmem:[%s310 + $0xb0] sm:$0xf]
        %v424 = vld [vmem:[%s310 + $0xb4] sm:$0xff]
        %v425 = vld [vmem:[%s310 + $0xbc] sm:$0xf]
        %v426 = vld [vmem:[#allocation6] sm:$0xf]
        %v427 = vld [vmem:[#allocation6 + $0x4] sm:$0xf]
        %v428 = vld [vmem:[#allocation6 + $0x8] sm:$0xf]
        %v429 = vld [vmem:[#allocation6 + $0xc] sm:$0xf]
        %v430 = vld [vmem:[#allocation6 + $0x10] sm:$0xf]
        %v431 = vld [vmem:[#allocation6 + $0x14] sm:$0xf]
        %v432 = vld [vmem:[#allocation6 + $0x18] sm:$0xf]
        %v433 = vld [vmem:[#allocation6 + $0x1c] sm:$0xf]
        %v434 = vld [vmem:[#allocation6 + $0x20] sm:$0xf]
        %v435 = vld [vmem:[#allocation6 + $0x24] sm:$0xf]
        %v436 = vld [vmem:[#allocation6 + $0x28] sm:$0xf]
        %v437 = vld [vmem:[#allocation6 + $0x2c] sm:$0xf]
        %v438 = vld [vmem:[#allocation6 + $0x30] sm:$0xf]
        %v439 = vld [vmem:[#allocation6 + $0x34] sm:$0xf]
        %v440 = vld [vmem:[#allocation6 + $0x38] sm:$0xf]
        %v441 = vld [vmem:[#allocation6 + $0x3c] sm:$0xf]
        %v442 = vld [vmem:[#allocation6 + $0x40] sm:$0xf]
        %v443 = vld [vmem:[#allocation6 + $0x44] sm:$0xf]
        %v444 = vld [vmem:[#allocation6 + $0x48] sm:$0xf]
        %v445 = vld [vmem:[#allocation6 + $0x4c] sm:$0xf]
        %v446 = vld [vmem:[#allocation6 + $0x50] sm:$0xf]
        %v447 = vld [vmem:[#allocation6 + $0x54] sm:$0xf]
        %v448 = vld [vmem:[#allocation6 + $0x58] sm:$0xf]
        %v449 = vld [vmem:[#allocation6 + $0x5c] sm:$0xf]
        %v450 = vld [vmem:[#allocation6 + $0x60] sm:$0xf]
        %v451 = vld [vmem:[#allocation6 + $0x64] sm:$0xf]
        %v452 = vld [vmem:[#allocation6 + $0x68] sm:$0xf]
        %v453 = vld [vmem:[#allocation6 + $0x6c] sm:$0xf]
        %v454 = vld [vmem:[#allocation6 + $0x70] sm:$0xf]
        %v455 = vld [vmem:[#allocation6 + $0x74] sm:$0xf]
        %v456 = vld [vmem:[#allocation6 + $0x78] sm:$0xf]
        %v457 = vld [vmem:[#allocation6 + $0x7c] sm:$0xf]
        %v458 = vld [vmem:[#allocation6 + $0x80] sm:$0xf]
        %v459 = vld [vmem:[#allocation6 + $0x84] sm:$0xf]
        %v460 = vld [vmem:[#allocation6 + $0x88] sm:$0xf]
        %v461 = vld [vmem:[#allocation6 + $0x8c] sm:$0xf]
        %v462 = vld [vmem:[#allocation6 + $0x90] sm:$0xf]
        %v463 = vld [vmem:[#allocation6 + $0x94] sm:$0xf]
        %v464 = vld [vmem:[#allocation6 + $0x98] sm:$0xf]
        %v465 = vld [vmem:[#allocation6 + $0x9c] sm:$0xf]
        %v466 = vld [vmem:[#allocation6 + $0xa0] sm:$0xf]
        %v467 = vld [vmem:[#allocation6 + $0xa4] sm:$0xf]
        %v468 = vld [vmem:[#allocation6 + $0xa8] sm:$0xf]
        %v469 = vld [vmem:[#allocation6 + $0xac] sm:$0xf]
        %v470 = vld [vmem:[#allocation6 + $0xb0] sm:$0xf]
        %v471 = vld [vmem:[#allocation6 + $0xb4] sm:$0xf]
        %v472 = vld [vmem:[#allocation6 + $0xb8] sm:$0xf]
        %v473 = vld [vmem:[#allocation6 + $0xbc] sm:$0xf]
        %v506 = vunpack.c.l.b16 %v394
        %v507 = vunpack.c.h.b16 %v394
        %v508 = vunpack.c.l.b16 %v395
        %v509 = vunpack.c.l.b16 %v396
        %v510 = vunpack.c.h.b16 %v396
        %v511 = vunpack.c.l.b16 %v397
        %v512 = vunpack.c.l.b16 %v398
        %v513 = vunpack.c.h.b16 %v398
        %v514 = vunpack.c.l.b16 %v399
        %v515 = vunpack.c.l.b16 %v400
        %v516 = vunpack.c.h.b16 %v400
        %v517 = vunpack.c.l.b16 %v401
        %v518 = vunpack.c.l.b16 %v402
        %v519 = vunpack.c.h.b16 %v402
        %v520 = vunpack.c.l.b16 %v403
        %v521 = vunpack.c.l.b16 %v404
        %v522 = vunpack.c.h.b16 %v404
        %v523 = vunpack.c.l.b16 %v405
        %v524 = vunpack.c.l.b16 %v406
        %v525 = vunpack.c.h.b16 %v406
        %v526 = vunpack.c.l.b16 %v407
        %v527 = vunpack.c.l.b16 %v408
        %v528 = vunpack.c.h.b16 %v408
        %v529 = vunpack.c.l.b16 %v409
        %v530 = vunpack.c.l.b16 %v410
        %v531 = vunpack.c.h.b16 %v410
        %v532 = vunpack.c.l.b16 %v411
        %v533 = vunpack.c.l.b16 %v412
        %v534 = vunpack.c.h.b16 %v412
        %v535 = vunpack.c.l.b16 %v413
        %v536 = vunpack.c.l.b16 %v414
        %v537 = vunpack.c.h.b16 %v414
        %v538 = vunpack.c.l.b16 %v415
        %v539 = vunpack.c.l.b16 %v416
        %v540 = vunpack.c.h.b16 %v416
        %v541 = vunpack.c.l.b16 %v417
        %v542 = vunpack.c.l.b16 %v418
        %v543 = vunpack.c.h.b16 %v418
        %v544 = vunpack.c.l.b16 %v419
        %v545 = vunpack.c.l.b16 %v420
        %v546 = vunpack.c.h.b16 %v420
        %v547 = vunpack.c.l.b16 %v421
        %v548 = vunpack.c.l.b16 %v422
        %v549 = vunpack.c.h.b16 %v422
        %v550 = vunpack.c.l.b16 %v423
        %v551 = vunpack.c.l.b16 %v424
        %v552 = vunpack.c.h.b16 %v424
        %v553 = vunpack.c.l.b16 %v425
        %v554 = vpack.c.b16 %v509, %v506
        %v555 = vpack.c.b16 %v510, %v507
        %v556 = vpack.c.b16 %v511, %v508
        %v557 = vpack.c.b16 %v515, %v512
        %v558 = vpack.c.b16 %v516, %v513
        %v559 = vpack.c.b16 %v517, %v514
        %v560 = vpack.c.b16 %v521, %v518
        %v561 = vpack.c.b16 %v522, %v519
        %v562 = vpack.c.b16 %v523, %v520
        %v563 = vpack.c.b16 %v527, %v524
        %v564 = vpack.c.b16 %v528, %v525
        %v565 = vpack.c.b16 %v529, %v526
        %v566 = vpack.c.b16 %v533, %v530
        %v567 = vpack.c.b16 %v534, %v531
        %v568 = vpack.c.b16 %v535, %v532
        %v569 = vpack.c.b16 %v539, %v536
        %v570 = vpack.c.b16 %v540, %v537
        %v571 = vpack.c.b16 %v541, %v538
        %v572 = vpack.c.b16 %v545, %v542
        %v573 = vpack.c.b16 %v546, %v543
        %v574 = vpack.c.b16 %v547, %v544
        %v575 = vpack.c.b16 %v551, %v548
        %v576 = vpack.c.b16 %v552, %v549
        %v577 = vpack.c.b16 %v553, %v550
        %v650 = vunpack.c.l.b16 %v426
        %v651 = vunpack.c.l.b16 %v427
        %v652 = vunpack.c.l.b16 %v428
        %v653 = vunpack.c.l.b16 %v429
        %v654 = vunpack.c.l.b16 %v430
        %v655 = vunpack.c.l.b16 %v431
        %v656 = vunpack.c.l.b16 %v432
        %v657 = vunpack.c.l.b16 %v433
        %v658 = vunpack.c.l.b16 %v434
        %v659 = vunpack.c.l.b16 %v435
        %v660 = vunpack.c.l.b16 %v436
        %v661 = vunpack.c.l.b16 %v437
        %v662 = vunpack.c.l.b16 %v438
        %v663 = vunpack.c.l.b16 %v439
        %v664 = vunpack.c.l.b16 %v440
        %v665 = vunpack.c.l.b16 %v441
        %v666 = vunpack.c.l.b16 %v442
        %v667 = vunpack.c.l.b16 %v443
        %v668 = vunpack.c.l.b16 %v444
        %v669 = vunpack.c.l.b16 %v445
        %v670 = vunpack.c.l.b16 %v446
        %v671 = vunpack.c.l.b16 %v447
        %v672 = vunpack.c.l.b16 %v448
        %v673 = vunpack.c.l.b16 %v449
        %v674 = vunpack.c.l.b16 %v450
        %v675 = vunpack.c.l.b16 %v451
        %v676 = vunpack.c.l.b16 %v452
        %v677 = vunpack.c.l.b16 %v453
        %v678 = vunpack.c.l.b16 %v454
        %v679 = vunpack.c.l.b16 %v455
        %v680 = vunpack.c.l.b16 %v456
        %v681 = vunpack.c.l.b16 %v457
        %v682 = vunpack.c.l.b16 %v458
        %v683 = vunpack.c.l.b16 %v459
        %v684 = vunpack.c.l.b16 %v460
        %v685 = vunpack.c.l.b16 %v461
        %v686 = vunpack.c.l.b16 %v462
        %v687 = vunpack.c.l.b16 %v463
        %v688 = vunpack.c.l.b16 %v464
        %v689 = vunpack.c.l.b16 %v465
        %v690 = vunpack.c.l.b16 %v466
        %v691 = vunpack.c.l.b16 %v467
        %v692 = vunpack.c.l.b16 %v468
        %v693 = vunpack.c.l.b16 %v469
        %v694 = vunpack.c.l.b16 %v470
        %v695 = vunpack.c.l.b16 %v471
        %v696 = vunpack.c.l.b16 %v472
        %v697 = vunpack.c.l.b16 %v473
        %v698 = vpack.c.b16 %v651, %v650
        %v699 = vpack.c.b16 %v653, %v652
        %v700 = vpack.c.b16 %v655, %v654
        %v701 = vpack.c.b16 %v657, %v656
        %v702 = vpack.c.b16 %v659, %v658
        %v703 = vpack.c.b16 %v661, %v660
        %v704 = vpack.c.b16 %v663, %v662
        %v705 = vpack.c.b16 %v665, %v664
        %v706 = vpack.c.b16 %v667, %v666
        %v707 = vpack.c.b16 %v669, %v668
        %v708 = vpack.c.b16 %v671, %v670
        %v709 = vpack.c.b16 %v673, %v672
        %v710 = vpack.c.b16 %v675, %v674
        %v711 = vpack.c.b16 %v677, %v676
        %v712 = vpack.c.b16 %v679, %v678
        %v713 = vpack.c.b16 %v681, %v680
        %v714 = vpack.c.b16 %v683, %v682
        %v715 = vpack.c.b16 %v685, %v684
        %v716 = vpack.c.b16 %v687, %v686
        %v717 = vpack.c.b16 %v689, %v688
        %v718 = vpack.c.b16 %v691, %v690
        %v719 = vpack.c.b16 %v693, %v692
        %v720 = vpack.c.b16 %v695, %v694
        %v721 = vpack.c.b16 %v697, %v696
        %746 = vmatprep.subr.bf16.mxu0 0
        %747 = vmatpush1.bf16.msra.mxu0 %v698
        %748 = vmatprep.subr.bf16.mxu0 0
        %749 = vmatpush1.bf16.msra.mxu0 %v699
        %750 = vmatprep.subr.bf16.mxu0 0
        %751 = vmatpush1.bf16.msra.mxu0 %v700
        %752 = vmatprep.subr.bf16.mxu0 0
        %753 = vmatpush1.bf16.msra.mxu0 %v701
        %754 = vmatprep.subr.bf16.mxu0 0
        %755 = vmatpush1.bf16.msra.mxu0 %v702
        %756 = vmatprep.subr.bf16.mxu0 0
        %757 = vmatpush1.bf16.msra.mxu0 %v703
        %758 = vmatprep.subr.bf16.mxu0 0
        %759 = vmatpush1.bf16.msra.mxu0 %v704
        %760 = vmatprep.subr.bf16.mxu0 0
        %761 = vmatpush1.bf16.msra.mxu0 %v705
        %762 = vmatprep.subr.bf16.mxu0 0
        %763 = vmatpush1.bf16.msra.mxu0 %v706
        %764 = vmatprep.subr.bf16.mxu0 0
        %765 = vmatpush1.bf16.msra.mxu0 %v707
        %766 = vmatprep.subr.bf16.mxu0 0
        %767 = vmatpush1.bf16.msra.mxu0 %v708
        %768 = vmatprep.subr.bf16.mxu0 0
        %769 = vmatpush1.bf16.msra.mxu0 %v709
        %770 = vmatprep.subr.bf16.mxu0 0
        %771 = vmatpush1.bf16.msra.mxu0 %v710
        %772 = vmatprep.subr.bf16.mxu0 0
        %773 = vmatpush1.bf16.msra.mxu0 %v711
        %774 = vmatprep.subr.bf16.mxu0 0
        %775 = vmatpush1.bf16.msra.mxu0 %v712
        %776 = vmatprep.subr.bf16.mxu0 0
        %777 = vmatpush1.bf16.msra.mxu0 %v713
        %778 = vmatprep.mubr.bf16.mxu0 %v555
        %779 = vmatmul.mubr.bf16.gmra.mrb[0].mxu0 %v554
        %v780 = vpop.f32.mrb[0].mxu0
        %v781 = vadd.f32 0.0, %v780
        %v782 = vpop.f32.mrb[0].mxu0
        %v783 = vpop.f32.mrb[0].mxu0
        %v784 = vadd.f32 0.0, %v783
        %v785 = vpop.f32.mrb[0].mxu0
        %786 = vmatprep.mubr.bf16.mxu0 %v558
        %787 = vmatmul.mubr.bf16.gmra.mrb[0].mxu0 %v557
        %v788 = vpop.f32.mrb[0].mxu0
        %v789 = vadd.f32 0.0, %v788
        %v790 = vpop.f32.mrb[0].mxu0
        %v791 = vpop.f32.mrb[0].mxu0
        %v792 = vadd.f32 0.0, %v791
        %v793 = vpop.f32.mrb[0].mxu0
        %794 = vmatprep.mubr.bf16.mxu0 %v561
        %795 = vmatmul.mubr.bf16.gmra.mrb[0].mxu0 %v560
        %v796 = vpop.f32.mrb[0].mxu0
        %v797 = vadd.f32 0.0, %v796
        %v798 = vpop.f32.mrb[0].mxu0
        %v799 = vpop.f32.mrb[0].mxu0
        %v800 = vadd.f32 0.0, %v799
        %v801 = vpop.f32.mrb[0].mxu0
        %802 = vmatprep.mubr.bf16.mxu0 %v564
        %803 = vmatmul.mubr.bf16.gmra.mrb[0].mxu0 %v563
        %v804 = vpop.f32.mrb[0].mxu0
        %v805 = vadd.f32 0.0, %v804
        %v806 = vpop.f32.mrb[0].mxu0
        %v807 = vpop.f32.mrb[0].mxu0
        %v808 = vadd.f32 0.0, %v807
        %v809 = vpop.f32.mrb[0].mxu0
        %810 = vmatprep.mubr.bf16.mxu0 %v567
        %811 = vmatmul.mubr.bf16.gmra.mrb[0].mxu0 %v566
        %v812 = vpop.f32.mrb[0].mxu0
        %v813 = vadd.f32 0.0, %v812
        %v814 = vpop.f32.mrb[0].mxu0
        %v815 = vpop.f32.mrb[0].mxu0
        %v816 = vadd.f32 0.0, %v815
        %v817 = vpop.f32.mrb[0].mxu0
        %818 = vmatprep.mubr.bf16.mxu0 %v570
        %819 = vmatmul.mubr.bf16.gmra.mrb[0].mxu0 %v569
        %v820 = vpop.f32.mrb[0].mxu0
        %v821 = vadd.f32 0.0, %v820
        %v822 = vpop.f32.mrb[0].mxu0
        %v823 = vpop.f32.mrb[0].mxu0
        %v824 = vadd.f32 0.0, %v823
        %v825 = vpop.f32.mrb[0].mxu0
        %826 = vmatprep.mubr.bf16.mxu0 %v573
        %827 = vmatmul.mubr.bf16.gmra.mrb[0].mxu0 %v572
        %v828 = vpop.f32.mrb[0].mxu0
        %v829 = vadd.f32 0.0, %v828
        %v830 = vpop.f32.mrb[0].mxu0
        %v831 = vpop.f32.mrb[0].mxu0
        %v832 = vadd.f32 0.0, %v831
        %v833 = vpop.f32.mrb[0].mxu0
        %834 = vmatprep.mubr.bf16.mxu0 %v576
        %835 = vmatmul.mubr.bf16.gmra.mrb[0].mxu0 %v575
        %v836 = vpop.f32.mrb[0].mxu0
        %v837 = vadd.f32 0.0, %v836
        %v838 = vpop.f32.mrb[0].mxu0
        %v839 = vpop.f32.mrb[0].mxu0
        %v840 = vadd.f32 0.0, %v839
        %v841 = vpop.f32.mrb[0].mxu0
        %842 = vdwg.mxu0
        %843 = vmatprep.subr.bf16.mxu0 0
        %844 = vmatpush1.bf16.msra.mxu0 %v714
        %845 = vmatprep.subr.bf16.mxu0 0
        %846 = vmatpush1.bf16.msra.mxu0 %v715
        %847 = vmatprep.subr.bf16.mxu0 0
        %848 = vmatpush1.bf16.msra.mxu0 %v716
        %849 = vmatprep.subr.bf16.mxu0 0
        %850 = vmatpush1.bf16.msra.mxu0 %v717
        %851 = vmatprep.subr.bf16.mxu0 0
        %852 = vmatpush1.bf16.msra.mxu0 %v718
        %853 = vmatprep.subr.bf16.mxu0 0
        %854 = vmatpush1.bf16.msra.mxu0 %v719
        %855 = vmatprep.subr.bf16.mxu0 0
        %856 = vmatpush1.bf16.msra.mxu0 %v720
        %857 = vmatprep.subr.bf16.mxu0 0
        %858 = vmatpush1.bf16.msra.mxu0 %v721
        %859 = vmatprep.subr.bf16.mxu0 0
        %860 = vmatpush1.bf16.msra.mxu0 0
        %861 = vmatprep.subr.bf16.mxu0 0
        %862 = vmatpush1.bf16.msra.mxu0 0
        %863 = vmatprep.subr.bf16.mxu0 0
        %864 = vmatpush1.bf16.msra.mxu0 0
        %865 = vmatprep.subr.bf16.mxu0 0
        %866 = vmatpush1.bf16.msra.mxu0 0
        %867 = vmatprep.subr.bf16.mxu0 0
        %868 = vmatpush1.bf16.msra.mxu0 0
        %869 = vmatprep.subr.bf16.mxu0 0
        %870 = vmatpush1.bf16.msra.mxu0 0
        %871 = vmatprep.subr.bf16.mxu0 0
        %872 = vmatpush1.bf16.msra.mxu0 0
        %873 = vmatprep.subr.bf16.mxu0 0
        %874 = vmatpush1.bf16.msra.mxu0 0
        %875 = vmatprep.mubr.bf16.mxu0 0
        %876 = vmatmul.mubr.bf16.gmra.mrb[0].mxu0 %v556
        %v877 = vpop.f32.mrb[0].mxu0
        %v878 = vadd.f32 %v781, %v877
        %v879 = vpop.f32.mrb[0].mxu0
        %v880 = vpop.f32.mrb[0].mxu0
        %v881 = vadd.f32 %v784, %v880
        %v882 = vpop.f32.mrb[0].mxu0
        %883 = vmatprep.mubr.bf16.mxu0 0
        %884 = vmatmul.mubr.bf16.gmra.mrb[0].mxu0 %v559
        %v885 = vpop.f32.mrb[0].mxu0
        %v886 = vadd.f32 %v789, %v885
        %v887 = vpop.f32.mrb[0].mxu0
        %v888 = vpop.f32.mrb[0].mxu0
        %v889 = vadd.f32 %v792, %v888
        %v890 = vpop.f32.mrb[0].mxu0
        %891 = vmatprep.mubr.bf16.mxu0 0
        %892 = vmatmul.mubr.bf16.gmra.mrb[0].mxu0 %v562
        %v893 = vpop.f32.mrb[0].mxu0
        %v894 = vadd.f32 %v797, %v893
        %v895 = vpop.f32.mrb[0].mxu0
        %v896 = vpop.f32.mrb[0].mxu0
        %v897 = vadd.f32 %v800, %v896
        %v898 = vpop.f32.mrb[0].mxu0
        %899 = vmatprep.mubr.bf16.mxu0 0
        %900 = vmatmul.mubr.bf16.gmra.mrb[0].mxu0 %v565
        %v901 = vpop.f32.mrb[0].mxu0
        %v902 = vadd.f32 %v805, %v901
        %v903 = vpop.f32.mrb[0].mxu0
        %v904 = vpop.f32.mrb[0].mxu0
        %v905 = vadd.f32 %v808, %v904
        %v906 = vpop.f32.mrb[0].mxu0
        %907 = vmatprep.mubr.bf16.mxu0 0
        %908 = vmatmul.mubr.bf16.gmra.mrb[0].mxu0 %v568
        %v909 = vpop.f32.mrb[0].mxu0
        %v910 = vadd.f32 %v813, %v909
        %v911 = vpop.f32.mrb[0].mxu0
        %v912 = vpop.f32.mrb[0].mxu0
        %v913 = vadd.f32 %v816, %v912
        %v914 = vpop.f32.mrb[0].mxu0
        %915 = vmatprep.mubr.bf16.mxu0 0
        %916 = vmatmul.mubr.bf16.gmra.mrb[0].mxu0 %v571
        %v917 = vpop.f32.mrb[0].mxu0
        %v918 = vadd.f32 %v821, %v917
        %v919 = vpop.f32.mrb[0].mxu0
        %v920 = vpop.f32.mrb[0].mxu0
        %v921 = vadd.f32 %v824, %v920
        %v922 = vpop.f32.mrb[0].mxu0
        %923 = vmatprep.mubr.bf16.mxu0 0
        %924 = vmatmul.mubr.bf16.gmra.mrb[0].mxu0 %v574
        %v925 = vpop.f32.mrb[0].mxu0
        %v926 = vadd.f32 %v829, %v925
        %v927 = vpop.f32.mrb[0].mxu0
        %v928 = vpop.f32.mrb[0].mxu0
        %v929 = vadd.f32 %v832, %v928
        %v930 = vpop.f32.mrb[0].mxu0
        %931 = vmatprep.mubr.bf16.mxu0 0
        %932 = vmatmul.mubr.bf16.gmra.mrb[0].mxu0 %v577
        %v933 = vpop.f32.mrb[0].mxu0
        %v934 = vadd.f32 %v837, %v933
        %v935 = vpop.f32.mrb[0].mxu0
        %v936 = vpop.f32.mrb[0].mxu0
        %v937 = vadd.f32 %v840, %v936
        %v938 = vpop.f32.mrb[0].mxu0
        %939 = vdwg.mxu0
        %v940 = vadd.f32 %v378, %v878
        %v941 = vadd.f32 %v379, %v881
        %v942 = vadd.f32 %v380, %v886
        %v943 = vadd.f32 %v381, %v889
        %v944 = vadd.f32 %v382, %v894
        %v945 = vadd.f32 %v383, %v897
        %v946 = vadd.f32 %v384, %v902
        %v947 = vadd.f32 %v385, %v905
        %v948 = vadd.f32 %v386, %v910
        %v949 = vadd.f32 %v387, %v913
        %v950 = vadd.f32 %v388, %v918
        %v951 = vadd.f32 %v389, %v921
        %v952 = vadd.f32 %v390, %v926
        %v953 = vadd.f32 %v391, %v929
        %v954 = vadd.f32 %v392, %v934
        %v955 = vadd.f32 %v393, %v937
        %956 = vst [vmem:[#allocation2] sm:$0xff] %v940
        %957 = vst [vmem:[#allocation2 + $0x8] sm:$0xff] %v941
        %958 = vst [vmem:[#allocation2 + $0x10] sm:$0xff] %v942
        %959 = vst [vmem:[#allocation2 + $0x18] sm:$0xff] %v943
        %960 = vst [vmem:[#allocation2 + $0x20] sm:$0xff] %v944
        %961 = vst [vmem:[#allocation2 + $0x28] sm:$0xff] %v945
        %962 = vst [vmem:[#allocation2 + $0x30] sm:$0xff] %v946
        %963 = vst [vmem:[#allocation2 + $0x38] sm:$0xff] %v947
        %964 = vst [vmem:[#allocation2 + $0x40] sm:$0xff] %v948
        %965 = vst [vmem:[#allocation2 + $0x48] sm:$0xff] %v949
        %966 = vst [vmem:[#allocation2 + $0x50] sm:$0xff] %v950
        %967 = vst [vmem:[#allocation2 + $0x58] sm:$0xff] %v951
        %968 = vst [vmem:[#allocation2 + $0x60] sm:$0xff] %v952
        %969 = vst [vmem:[#allocation2 + $0x68] sm:$0xff] %v953
        %970 = vst [vmem:[#allocation2 + $0x70] sm:$0xff] %v954
        %971 = vst [vmem:[#allocation2 + $0x78] sm:$0xff] %v955
        // Predicated region
        $region65: #{tpu_custom_call.1} parent=39 // pred_check
          %p972 = pneg %p358
        $region66: #{tpu_custom_call.1} parent=39 // pred_check_branch
          %974 = sbr.rel (%p972) target = $region68
        $region67: #{tpu_custom_call.1} parent=39 // pred_region
          %v975 = vld [vmem:[#allocation2] sm:$0xff]
          %v976 = vld [vmem:[#allocation2 + $0x8] sm:$0xff]
          %v977 = vld [vmem:[#allocation2 + $0x10] sm:$0xff]
          %v978 = vld [vmem:[#allocation2 + $0x18] sm:$0xff]
          %v979 = vld [vmem:[#allocation2 + $0x20] sm:$0xff]
          %v980 = vld [vmem:[#allocation2 + $0x28] sm:$0xff]
          %v981 = vld [vmem:[#allocation2 + $0x30] sm:$0xff]
          %v982 = vld [vmem:[#allocation2 + $0x38] sm:$0xff]
          %v983 = vld [vmem:[#allocation2 + $0x40] sm:$0xff]
          %v984 = vld [vmem:[#allocation2 + $0x48] sm:$0xff]
          %v985 = vld [vmem:[#allocation2 + $0x50] sm:$0xff]
          %v986 = vld [vmem:[#allocation2 + $0x58] sm:$0xff]
          %v987 = vld [vmem:[#allocation2 + $0x60] sm:$0xff]
          %v988 = vld [vmem:[#allocation2 + $0x68] sm:$0xff]
          %v989 = vld [vmem:[#allocation2 + $0x70] sm:$0xff]
          %v990 = vld [vmem:[#allocation2 + $0x78] sm:$0xff]
          %v991 = vld [vmem:[#allocation8] sm:$0x1]
          %v993 = vlaneseq
          %v994 = vshrl.u32 %v993, 7
          %v995 = vsub.s32 0, %v994
          %v996 = vrot.slane %v991, %v995
          %v998 = vadd.f32 %v975, %v996
          %v999 = vadd.f32 %v976, %v996
          %v1000 = vadd.f32 %v977, %v996
          %v1001 = vadd.f32 %v978, %v996
          %v1002 = vadd.f32 %v979, %v996
          %v1003 = vadd.f32 %v980, %v996
          %v1004 = vadd.f32 %v981, %v996
          %v1005 = vadd.f32 %v982, %v996
          %v1006 = vadd.f32 %v983, %v996
          %v1007 = vadd.f32 %v984, %v996
          %v1008 = vadd.f32 %v985, %v996
          %v1009 = vadd.f32 %v986, %v996
          %v1010 = vadd.f32 %v987, %v996
          %v1011 = vadd.f32 %v988, %v996
          %v1012 = vadd.f32 %v989, %v996
          %v1013 = vadd.f32 %v990, %v996
          %v1014 = vlaneseq
          %v1015 = vand.u32 %v1014, 127
          %vm1016 = vcmp.lt.s32.totalorder %v1015, 48
          %v1017 = vsel %vm1016, %v998, 0.0
          %v1018 = vsel %vm1016, %v999, 0.0
          %v1019 = vsel %vm1016, %v1000, 0.0
          %v1020 = vsel %vm1016, %v1001, 0.0
          %v1021 = vsel %vm1016, %v1002, 0.0
          %v1022 = vsel %vm1016, %v1003, 0.0
          %v1023 = vsel %vm1016, %v1004, 0.0
          %v1024 = vsel %vm1016, %v1005, 0.0
          %v1025 = vsel %vm1016, %v1006, 0.0
          %v1026 = vsel %vm1016, %v1007, 0.0
          %v1027 = vsel %vm1016, %v1008, 0.0
          %v1028 = vsel %vm1016, %v1009, 0.0
          %v1029 = vsel %vm1016, %v1010, 0.0
          %v1030 = vsel %vm1016, %v1011, 0.0
          %v1031 = vsel %vm1016, %v1012, 0.0
          %v1032 = vsel %vm1016, %v1013, 0.0
          %1033 = vadd.xlane.f32.xlu0 %v1017
          %v1034 = vpop.xlane.xlu0 %1033
          %1035 = vadd.xlane.f32.xlu0 %v1018
          %v1036 = vpop.xlane.xlu0 %1035
          %1037 = vadd.xlane.f32.xlu0 %v1019
          %v1038 = vpop.xlane.xlu0 %1037
          %1039 = vadd.xlane.f32.xlu0 %v1020
          %v1040 = vpop.xlane.xlu0 %1039
          %1041 = vadd.xlane.f32.xlu0 %v1021
          %v1042 = vpop.xlane.xlu0 %1041
          %1043 = vadd.xlane.f32.xlu0 %v1022
          %v1044 = vpop.xlane.xlu0 %1043
          %1045 = vadd.xlane.f32.xlu0 %v1023
          %v1046 = vpop.xlane.xlu0 %1045
          %1047 = vadd.xlane.f32.xlu0 %v1024
          %v1048 = vpop.xlane.xlu0 %1047
          %1049 = vadd.xlane.f32.xlu0 %v1025
          %v1050 = vpop.xlane.xlu0 %1049
          %1051 = vadd.xlane.f32.xlu0 %v1026
          %v1052 = vpop.xlane.xlu0 %1051
          %1053 = vadd.xlane.f32.xlu0 %v1027
          %v1054 = vpop.xlane.xlu0 %1053
          %1055 = vadd.xlane.f32.xlu0 %v1028
          %v1056 = vpop.xlane.xlu0 %1055
          %1057 = vadd.xlane.f32.xlu0 %v1029
          %v1058 = vpop.xlane.xlu0 %1057
          %1059 = vadd.xlane.f32.xlu0 %v1030
          %v1060 = vpop.xlane.xlu0 %1059
          %1061 = vadd.xlane.f32.xlu0 %v1031
          %v1062 = vpop.xlane.xlu0 %1061
          %1063 = vadd.xlane.f32.xlu0 %v1032
          %v1064 = vpop.xlane.xlu0 %1063
          %v1065 = vmul.f32 %v1034, 0.020833334
          %v1066 = vmul.f32 %v1036, 0.020833334
          %v1067 = vmul.f32 %v1038, 0.020833334
          %v1068 = vmul.f32 %v1040, 0.020833334
          %v1069 = vmul.f32 %v1042, 0.020833334
          %v1070 = vmul.f32 %v1044, 0.020833334
          %v1071 = vmul.f32 %v1046, 0.020833334
          %v1072 = vmul.f32 %v1048, 0.020833334
          %v1073 = vmul.f32 %v1050, 0.020833334
          %v1074 = vmul.f32 %v1052, 0.020833334
          %v1075 = vmul.f32 %v1054, 0.020833334
          %v1076 = vmul.f32 %v1056, 0.020833334
          %v1077 = vmul.f32 %v1058, 0.020833334
          %v1078 = vmul.f32 %v1060, 0.020833334
          %v1079 = vmul.f32 %v1062, 0.020833334
          %v1080 = vmul.f32 %v1064, 0.020833334
          %v1081 = vsub.f32 %v998, %v1065
          %v1082 = vsub.f32 %v999, %v1066
          %v1083 = vsub.f32 %v1000, %v1067
          %v1084 = vsub.f32 %v1001, %v1068
          %v1085 = vsub.f32 %v1002, %v1069
          %v1086 = vsub.f32 %v1003, %v1070
          %v1087 = vsub.f32 %v1004, %v1071
          %v1088 = vsub.f32 %v1005, %v1072
          %v1089 = vsub.f32 %v1006, %v1073
          %v1090 = vsub.f32 %v1007, %v1074
          %v1091 = vsub.f32 %v1008, %v1075
          %v1092 = vsub.f32 %v1009, %v1076
          %v1093 = vsub.f32 %v1010, %v1077
          %v1094 = vsub.f32 %v1011, %v1078
          %v1095 = vsub.f32 %v1012, %v1079
          %v1096 = vsub.f32 %v1013, %v1080
          %v1097 = vsel %vm1016, %v1081, 0.0
          %v1098 = vsel %vm1016, %v1082, 0.0
          %v1099 = vsel %vm1016, %v1083, 0.0
          %v1100 = vsel %vm1016, %v1084, 0.0
          %v1101 = vsel %vm1016, %v1085, 0.0
          %v1102 = vsel %vm1016, %v1086, 0.0
          %v1103 = vsel %vm1016, %v1087, 0.0
          %v1104 = vsel %vm1016, %v1088, 0.0
          %v1105 = vsel %vm1016, %v1089, 0.0
          %v1106 = vsel %vm1016, %v1090, 0.0
          %v1107 = vsel %vm1016, %v1091, 0.0
          %v1108 = vsel %vm1016, %v1092, 0.0
          %v1109 = vsel %vm1016, %v1093, 0.0
          %v1110 = vsel %vm1016, %v1094, 0.0
          %v1111 = vsel %vm1016, %v1095, 0.0
          %v1112 = vsel %vm1016, %v1096, 0.0
          %v1113 = vmul.f32 %v1097, %v1097
          %v1114 = vmul.f32 %v1098, %v1098
          %v1115 = vmul.f32 %v1099, %v1099
          %v1116 = vmul.f32 %v1100, %v1100
          %v1117 = vmul.f32 %v1101, %v1101
          %v1118 = vmul.f32 %v1102, %v1102
          %v1119 = vmul.f32 %v1103, %v1103
          %v1120 = vmul.f32 %v1104, %v1104
          %v1121 = vmul.f32 %v1105, %v1105
          %v1122 = vmul.f32 %v1106, %v1106
          %v1123 = vmul.f32 %v1107, %v1107
          %v1124 = vmul.f32 %v1108, %v1108
          %v1125 = vmul.f32 %v1109, %v1109
          %v1126 = vmul.f32 %v1110, %v1110
          %v1127 = vmul.f32 %v1111, %v1111
          %v1128 = vmul.f32 %v1112, %v1112
          %1129 = vadd.xlane.f32.xlu0 %v1113
          %v1130 = vpop.xlane.xlu0 %1129
          %1131 = vadd.xlane.f32.xlu0 %v1114
          %v1132 = vpop.xlane.xlu0 %1131
          %1133 = vadd.xlane.f32.xlu0 %v1115
          %v1134 = vpop.xlane.xlu0 %1133
          %1135 = vadd.xlane.f32.xlu0 %v1116
          %v1136 = vpop.xlane.xlu0 %1135
          %1137 = vadd.xlane.f32.xlu0 %v1117
          %v1138 = vpop.xlane.xlu0 %1137
          %1139 = vadd.xlane.f32.xlu0 %v1118
          %v1140 = vpop.xlane.xlu0 %1139
          %1141 = vadd.xlane.f32.xlu0 %v1119
          %v1142 = vpop.xlane.xlu0 %1141
          %1143 = vadd.xlane.f32.xlu0 %v1120
          %v1144 = vpop.xlane.xlu0 %1143
          %1145 = vadd.xlane.f32.xlu0 %v1121
          %v1146 = vpop.xlane.xlu0 %1145
          %1147 = vadd.xlane.f32.xlu0 %v1122
          %v1148 = vpop.xlane.xlu0 %1147
          %1149 = vadd.xlane.f32.xlu0 %v1123
          %v1150 = vpop.xlane.xlu0 %1149
          %1151 = vadd.xlane.f32.xlu0 %v1124
          %v1152 = vpop.xlane.xlu0 %1151
          %1153 = vadd.xlane.f32.xlu0 %v1125
          %v1154 = vpop.xlane.xlu0 %1153
          %1155 = vadd.xlane.f32.xlu0 %v1126
          %v1156 = vpop.xlane.xlu0 %1155
          %1157 = vadd.xlane.f32.xlu0 %v1127
          %v1158 = vpop.xlane.xlu0 %1157
          %1159 = vadd.xlane.f32.xlu0 %v1128
          %v1160 = vpop.xlane.xlu0 %1159
          %v1161 = vmul.f32 %v1130, 0.020833334
          %v1162 = vmul.f32 %v1132, 0.020833334
          %v1163 = vmul.f32 %v1134, 0.020833334
          %v1164 = vmul.f32 %v1136, 0.020833334
          %v1165 = vmul.f32 %v1138, 0.020833334
          %v1166 = vmul.f32 %v1140, 0.020833334
          %v1167 = vmul.f32 %v1142, 0.020833334
          %v1168 = vmul.f32 %v1144, 0.020833334
          %v1169 = vmul.f32 %v1146, 0.020833334
          %v1170 = vmul.f32 %v1148, 0.020833334
          %v1171 = vmul.f32 %v1150, 0.020833334
          %v1172 = vmul.f32 %v1152, 0.020833334
          %v1173 = vmul.f32 %v1154, 0.020833334
          %v1174 = vmul.f32 %v1156, 0.020833334
          %v1175 = vmul.f32 %v1158, 0.020833334
          %v1176 = vmul.f32 %v1160, 0.020833334
          %v1177 = vadd.f32 %v1161, 1e-06
          %v1178 = vadd.f32 %v1162, 1e-06
          %v1179 = vadd.f32 %v1163, 1e-06
          %v1180 = vadd.f32 %v1164, 1e-06
          %v1181 = vadd.f32 %v1165, 1e-06
          %v1182 = vadd.f32 %v1166, 1e-06
          %v1183 = vadd.f32 %v1167, 1e-06
          %v1184 = vadd.f32 %v1168, 1e-06
          %v1185 = vadd.f32 %v1169, 1e-06
          %v1186 = vadd.f32 %v1170, 1e-06
          %v1187 = vadd.f32 %v1171, 1e-06
          %v1188 = vadd.f32 %v1172, 1e-06
          %v1189 = vadd.f32 %v1173, 1e-06
          %v1190 = vadd.f32 %v1174, 1e-06
          %v1191 = vadd.f32 %v1175, 1e-06
          %v1192 = vadd.f32 %v1176, 1e-06
          %v1193 = vrsqrt.pop %v1177
          %v1194 = vrsqrt.pop %v1178
          %v1195 = vrsqrt.pop %v1179
          %v1196 = vrsqrt.pop %v1180
          %v1197 = vrsqrt.pop %v1181
          %v1198 = vrsqrt.pop %v1182
          %v1199 = vrsqrt.pop %v1183
          %v1200 = vrsqrt.pop %v1184
          %v1201 = vrsqrt.pop %v1185
          %v1202 = vrsqrt.pop %v1186
          %v1203 = vrsqrt.pop %v1187
          %v1204 = vrsqrt.pop %v1188
          %v1205 = vrsqrt.pop %v1189
          %v1206 = vrsqrt.pop %v1190
          %v1207 = vrsqrt.pop %v1191
          %v1208 = vrsqrt.pop %v1192
          %v1209 = vmul.f32 %v1081, %v1193
          %v1210 = vmul.f32 %v1082, %v1194
          %v1211 = vmul.f32 %v1083, %v1195
          %v1212 = vmul.f32 %v1084, %v1196
          %v1213 = vmul.f32 %v1085, %v1197
          %v1214 = vmul.f32 %v1086, %v1198
          %v1215 = vmul.f32 %v1087, %v1199
          %v1216 = vmul.f32 %v1088, %v1200
          %v1217 = vmul.f32 %v1089, %v1201
          %v1218 = vmul.f32 %v1090, %v1202
          %v1219 = vmul.f32 %v1091, %v1203
          %v1220 = vmul.f32 %v1092, %v1204
          %v1221 = vmul.f32 %v1093, %v1205
          %v1222 = vmul.f32 %v1094, %v1206
          %v1223 = vmul.f32 %v1095, %v1207
          %v1224 = vmul.f32 %v1096, %v1208
          %v1225 = vld [vmem:[#allocation9] sm:$0x1]
          %v1227 = vlaneseq
          %v1228 = vshrl.u32 %v1227, 7
          %v1229 = vsub.s32 0, %v1228
          %v1230 = vrot.slane %v1225, %v1229
          %v1232 = vmul.f32 %v1209, %v1230
          %v1233 = vmul.f32 %v1210, %v1230
          %v1234 = vmul.f32 %v1211, %v1230
          %v1235 = vmul.f32 %v1212, %v1230
          %v1236 = vmul.f32 %v1213, %v1230
          %v1237 = vmul.f32 %v1214, %v1230
          %v1238 = vmul.f32 %v1215, %v1230
          %v1239 = vmul.f32 %v1216, %v1230
          %v1240 = vmul.f32 %v1217, %v1230
          %v1241 = vmul.f32 %v1218, %v1230
          %v1242 = vmul.f32 %v1219, %v1230
          %v1243 = vmul.f32 %v1220, %v1230
          %v1244 = vmul.f32 %v1221, %v1230
          %v1245 = vmul.f32 %v1222, %v1230
          %v1246 = vmul.f32 %v1223, %v1230
          %v1247 = vmul.f32 %v1224, %v1230
          %v1248 = vld [vmem:[#allocation11] sm:$0x1]
          %v1250 = vlaneseq
          %v1251 = vshrl.u32 %v1250, 7
          %v1252 = vsub.s32 0, %v1251
          %v1253 = vrot.slane %v1248, %v1252
          %v1255 = vadd.f32 %v1232, %v1253
          %v1256 = vadd.f32 %v1233, %v1253
          %v1257 = vadd.f32 %v1234, %v1253
          %v1258 = vadd.f32 %v1235, %v1253
          %v1259 = vadd.f32 %v1236, %v1253
          %v1260 = vadd.f32 %v1237, %v1253
          %v1261 = vadd.f32 %v1238, %v1253
          %v1262 = vadd.f32 %v1239, %v1253
          %v1263 = vadd.f32 %v1240, %v1253
          %v1264 = vadd.f32 %v1241, %v1253
          %v1265 = vadd.f32 %v1242, %v1253
          %v1266 = vadd.f32 %v1243, %v1253
          %v1267 = vadd.f32 %v1244, %v1253
          %v1268 = vadd.f32 %v1245, %v1253
          %v1269 = vadd.f32 %v1246, %v1253
          %v1270 = vadd.f32 %v1247, %v1253
          %1271 = vst [vmem:[%s352] sm:$0xff] %v1255
          %1272 = vst [vmem:[%s352 + $0x8] sm:$0xff] %v1256
          %1273 = vst [vmem:[%s352 + $0x10] sm:$0xff] %v1257
          %1274 = vst [vmem:[%s352 + $0x18] sm:$0xff] %v1258
          %1275 = vst [vmem:[%s352 + $0x20] sm:$0xff] %v1259
          %1276 = vst [vmem:[%s352 + $0x28] sm:$0xff] %v1260
          %1277 = vst [vmem:[%s352 + $0x30] sm:$0xff] %v1261
          %1278 = vst [vmem:[%s352 + $0x38] sm:$0xff] %v1262
          %1279 = vst [vmem:[%s352 + $0x40] sm:$0xff] %v1263
          %1280 = vst [vmem:[%s352 + $0x48] sm:$0xff] %v1264
          %1281 = vst [vmem:[%s352 + $0x50] sm:$0xff] %v1265
          %1282 = vst [vmem:[%s352 + $0x58] sm:$0xff] %v1266
          %1283 = vst [vmem:[%s352 + $0x60] sm:$0xff] %v1267
          %1284 = vst [vmem:[%s352 + $0x68] sm:$0xff] %v1268
          %1285 = vst [vmem:[%s352 + $0x70] sm:$0xff] %v1269
          %1286 = vst [vmem:[%s352 + $0x78] sm:$0xff] %v1270
        $region68: #{tpu_custom_call.1} parent=39 // pred_fallthru
          _
        %s1287 = sand.u32 %s187, 1
        %s1288 = scalar_lea.sflag [#allocation5], %s1287
        %s1289 = sand.u32 %s187, 1
        %s1290 = smul.addr %s1289, 128
        %s1291 = scalar_lea.vmem [#allocation12], %s1290
        // Predicated region
        $region69: #{tpu_custom_call.1} parent=39 // pred_check
          %p1292 = pneg %p197
        $region70: #{tpu_custom_call.1} parent=39 // pred_check_branch
          %1294 = sbr.rel (%p1292) target = $region72
        $region71: #{tpu_custom_call.1} parent=39 // pred_region
          %s1295 = smul.u32 16, %s29
          %s1297 = ssub.s32 2048, 2048
          %1298 = vsyncadd %s1288, %s1297
          %s1299 = sadd.s32 %s30, %s1295
          %s1300 = smul.addr %s1299, 128
          %s1301 = scalar_lea.hbm %s5, %s1300
          %s1302 = sshll.u32 %s1291, 4
          %s1303 = int_to_ptr.vmem [resolvable:$true] %s1302
          %1308 = dma.vmem_to_hbm [thread:$0]  %s1303, 2048, %s1301, %s1288, 128, 128, 8
        $region72: #{tpu_custom_call.1} parent=39 // pred_fallthru
          _
      $region40: #{tpu_custom_call.1} parent=5 // pred_fallthru
        _
      %p1309 = scmp.le.s32.totalorder 2, %s19
      // Predicated region
      $region73: #{tpu_custom_call.1} parent=5 // pred_check
        %p1310 = pneg %p1309
      $region74: #{tpu_custom_call.1} parent=5 // pred_check_branch
        %1312 = sbr.rel (%p1310) target = $region76
      $region75: #{tpu_custom_call.1} parent=5 // pred_region
        %s1313 = ssub.s32 %s19, 2
        // Predicated region
        $region77: #{tpu_custom_call.1} parent=75 // pred_check
          %p1314 = pneg %p203
        $region78: #{tpu_custom_call.1} parent=75 // pred_check_branch
          %1316 = sbr.rel (%p1314) target = $region80
        $region79: #{tpu_custom_call.1} parent=75 // pred_region
          %s1317 = sand.u32 %s188, 1
          %s1318 = scalar_lea.sflag [#allocation5], %s1317
          %s1319 = sand.u32 %s188, 1
          %s1320 = smul.addr %s1319, 128
          %s1321 = scalar_lea.vmem [#allocation12], %s1320
          %1322 = dma.done %s1318, 2048
        $region80: #{tpu_custom_call.1} parent=75 // pred_fallthru
          _
      $region76: #{tpu_custom_call.1} parent=5 // pred_fallthru
        _
    $region6: #{tpu_custom_call.1} parent=1 // loop_footer
      %s23 = sadd.s32 1, %s19
    $region7: #{tpu_custom_call.1} parent=1 // loop_footer_branch
      %18 = sbr.rel target = $region3
    $region8: #{tpu_custom_call.1} parent=1 // loop_exit
      _
    %1323 = vsyncpa [#allocation4], 1
    %s1324 = scalar_lea.sflag [#allocation4], 1
    %1325 = vsyncpa %s1324, 1
    %1326 = vsyncpa [#allocation7], 1
    %1327 = vsyncpa [#allocation10], 1
    %1328 = vsyncpa [#allocation5], 1
    %s1329 = scalar_lea.sflag [#allocation5], 1
    %1330 = vsyncpa %s1329, 1

</llo_original>
